<compile_context>
chip_gen: v7x
topology: tpu7x:2x2x1
jax: 0.10.0
libtpu: 0.0.40
codegen_flags: <defaults>
</compile_context>

<pallas_src>
import functools

import jax
import jax.numpy as jnp
from jax import lax
from jax.experimental import pallas as pl
from jax.experimental.pallas import tpu as pltpu

LANE = 128
SUBLANE = 8


def _round_up(n, m):
    return ((n + m - 1) // m) * m


def _pick_tb(T, max_tb=8):
    for cand in (max_tb, 4, 2, 1):
        if cand <= T and T % cand == 0:
            return cand
    return 1


# ---------------------------------------------------------------------------
# Kernel: one grid step = Tb RNN timesteps for one batch block.
# ---------------------------------------------------------------------------
def rnn_agent_seq_kernel(x_ref, h0_ref,
                         w1_ref, b1_ref,
                         wg_ref, bg_ref,
                         w2_ref, b2_ref,
                         q_ref, hout_ref,
                         h_sc):
    """
    x_ref:  (Tb, BB, In) bf16 input slab for this time block (In unpadded)
    h0_ref: (BB, Hp)     f32 initial hidden state (read only at time-block 0)
    w1_ref: (In, Hp)     bf16 fc1 weight (zero padded cols)
    wg_ref: (2*Hp, 4Hp)  bf16 fused GRU gate weight  rows=[x1 | h], cols=[r | z | i_n | h_n]
    w2_ref: (Hp, Ap)     bf16 fc2 weight
    q_ref:  (Tb, BB, Ap) bf16 per-step Q output slab
    hout_ref: (BB, Hp)   f32 final hidden state (written at last time block)
    h_sc:   (BB, Hp)     f32 VMEM scratch carrying h across time blocks
    """
    tb = pl.program_id(1)
    Tb, BB, _ = x_ref.shape
    Hp = h0_ref.shape[-1]
    Ap = w2_ref.shape[-1]

    @pl.when(tb == 0)
    def _():
        h_sc[...] = h0_ref[...]

    # Resident weights; hoist bias broadcasts out of the unrolled timestep loop.
    w1 = w1_ref[...]
    wg = wg_ref[...]
    w2 = w2_ref[...]
    b1 = jnp.broadcast_to(b1_ref[...], (BB, Hp))
    bg = jnp.broadcast_to(bg_ref[...], (BB, 4 * Hp))
    b2 = jnp.broadcast_to(b2_ref[...], (BB, Ap))

    def step(t, h):
        # ---- fc1 + ReLU (bf16 in, f32 accumulate) ----
        x = x_ref[t]                                                   # (BB, In) bf16
        x1 = jnp.dot(x, w1, preferred_element_type=jnp.float32) + b1
        x1 = jnp.maximum(x1, 0.0)

        # ---- GRUCell: single fused gate matmul, K = 2*Hp ----
        xh = jnp.concatenate(
            [x1.astype(jnp.bfloat16), h.astype(jnp.bfloat16)], axis=-1)  # (BB, 2*Hp) bf16
        g = jnp.dot(xh, wg, preferred_element_type=jnp.float32) + bg

        r = jax.nn.sigmoid(g[:, 0:Hp])                 # i_r + h_r (+ combined bias)
        z = jax.nn.sigmoid(g[:, Hp:2 * Hp])            # i_z + h_z (+ combined bias)
        i_n = g[:, 2 * Hp:3 * Hp]                      # x1 @ w_ih_n + b_ih_n
        h_n = g[:, 3 * Hp:4 * Hp]                      # h  @ w_hh_n + b_hh_n
        n = jnp.tanh(i_n + r * h_n)
        h_new = (1.0 - z) * n + z * h

        # ---- fc2 ----
        q = jnp.dot(h_new.astype(jnp.bfloat16), w2,
                    preferred_element_type=jnp.float32) + b2
        q_ref[t] = q.astype(q_ref.dtype)
        return h_new

    h_final = lax.fori_loop(0, Tb, step, h_sc[...], unroll=True)
    h_sc[...] = h_final

    @pl.when(tb == pl.num_programs(1) - 1)
    def _():
        hout_ref[...] = h_final.astype(hout_ref.dtype)


# ---------------------------------------------------------------------------
# Parameter packing (done ONCE, outside jit): pad to lane-aligned, fuse GRU gate
# weights, cast weights to bf16.  Padded rows/cols/bias entries are zero.
# ---------------------------------------------------------------------------
def pack_params(params, input_shape, H, A):
    In = input_shape
    Hp = _round_up(H, LANE)
    Ap = _round_up(A, LANE)

    w1 = jnp.zeros((In, Hp), jnp.float32).at[:, :H].set(params["w1"])
    b1 = jnp.zeros((1, Hp), jnp.float32).at[0, :H].set(params["b1"])

    wih, whh = params["w_ih"], params["w_hh"]     # (H, 3H), stored transposed vs torch
    bih, bhh = params["b_ih"], params["b_hh"]     # (3H,)

    wg = jnp.zeros((2 * Hp, 4 * Hp), jnp.float32)
    # r gate (cols 0:Hp)
    wg = wg.at[:H, 0:H].set(wih[:, 0:H])
    wg = wg.at[Hp:Hp + H, 0:H].set(whh[:, 0:H])
    # z gate (cols Hp:2Hp)
    wg = wg.at[:H, Hp:Hp + H].set(wih[:, H:2 * H])
    wg = wg.at[Hp:Hp + H, Hp:Hp + H].set(whh[:, H:2 * H])
    # i_n (cols 2Hp:3Hp) -- input path only
    wg = wg.at[:H, 2 * Hp:2 * Hp + H].set(wih[:, 2 * H:3 * H])
    # h_n (cols 3Hp:4Hp) -- hidden path only
    wg = wg.at[Hp:Hp + H, 3 * Hp:3 * Hp + H].set(whh[:, 2 * H:3 * H])

    bg = jnp.zeros((1, 4 * Hp), jnp.float32)
    bg = bg.at[0, 0:H].set(bih[0:H] + bhh[0:H])
    bg = bg.at[0, Hp:Hp + H].set(bih[H:2 * H] + bhh[H:2 * H])
    bg = bg.at[0, 2 * Hp:2 * Hp + H].set(bih[2 * H:3 * H])
    bg = bg.at[0, 3 * Hp:3 * Hp + H].set(bhh[2 * H:3 * H])

    w2 = jnp.zeros((Hp, Ap), jnp.float32).at[:H, :A].set(params["w2"])
    b2 = jnp.zeros((1, Ap), jnp.float32).at[0, :A].set(params["b2"])

    # Arrays only (so the dict can be a plain traced pytree argument of the jit).
    return dict(
        w1=w1.astype(jnp.bfloat16), b1=b1,
        wg=wg.astype(jnp.bfloat16), bg=bg,
        w2=w2.astype(jnp.bfloat16), b2=b2,
    )


# ---------------------------------------------------------------------------
# Wrappers
# ---------------------------------------------------------------------------
@functools.partial(jax.jit, static_argnames=("H", "A"))
def rnn_agent_forward_seq(inputs_seq, hidden_state, packed, *, H, A):
    """Fused T-step rollout.

    inputs_seq:   (T, B, input_shape) f32   (B = bs * n_agents, flattened)
    hidden_state: (..., H) f32, reshaped to (B, H)  (mirrors torch .reshape(-1, H))
    packed:       dict from pack_params (bf16 weights, padded)
    returns: q_seq (T, B, n_actions) f32, h_final (B, H) f32
    """
    T, B, In = inputs_seq.shape
    Hp = packed["w1"].shape[1]
    Ap = packed["w2"].shape[1]
    hidden_state = hidden_state.reshape(-1, H)

    Tb = _pick_tb(T)

    # Batch padding / blocking: sublane multiple; block at 128 rows for large B so the
    # leading ("parallel") grid axis can shard across TensorCores on v7x.
    pB = _round_up(B, SUBLANE)
    if pB > LANE:
        pB = _round_up(pB, LANE)
        BB = LANE
    else:
        BB = pB
    nbb = pB // BB

    # Streamed input: bf16, lane dim left at the true In (no 8x lane padding).
    x_bf = inputs_seq.astype(jnp.bfloat16)
    if pB == B:
        xpad = x_bf
    else:
        xpad = jnp.zeros((T, pB, In), jnp.bfloat16).at[:, :B, :].set(x_bf)
    hpad = jnp.zeros((pB, Hp), jnp.float32).at[:B, :H].set(hidden_state)

    const2 = lambda i, t: (0, 0)

    q_pad, h_pad = pl.pallas_call(
        rnn_agent_seq_kernel,
        out_shape=(
            jax.ShapeDtypeStruct((T, pB, Ap), jnp.bfloat16),
            jax.ShapeDtypeStruct((pB, Hp), jnp.float32),
        ),
        grid_spec=pltpu.PrefetchScalarGridSpec(
            num_scalar_prefetch=0,
            grid=(nbb, T // Tb),
            in_specs=[
                pl.BlockSpec((Tb, BB, In), lambda i, t: (t, i, 0)),     # x time-block
                pl.BlockSpec((BB, Hp), lambda i, t: (i, 0)),            # h0
                pl.BlockSpec((In, Hp), const2),                         # w1   (resident)
                pl.BlockSpec((1, Hp), const2),                          # b1
                pl.BlockSpec((2 * Hp, 4 * Hp), const2),                 # wg   (resident)
                pl.BlockSpec((1, 4 * Hp), const2),                      # bg
                pl.BlockSpec((Hp, Ap), const2),                         # w2   (resident)
                pl.BlockSpec((1, Ap), const2),                          # b2
            ],
            out_specs=(
                pl.BlockSpec((Tb, BB, Ap), lambda i, t: (t, i, 0)),     # q time-block
                pl.BlockSpec((BB, Hp), lambda i, t: (i, 0)),            # final h
            ),
            scratch_shapes=[pltpu.VMEM((BB, Hp), jnp.float32)],         # recurrent carry
        ),
        compiler_params=pltpu.CompilerParams(
            dimension_semantics=("parallel", "arbitrary")),
    )(xpad, hpad,
      packed["w1"], packed["b1"],
      packed["wg"], packed["bg"],
      packed["w2"], packed["b2"])

    return q_pad[:, :B, :A].astype(jnp.float32), h_pad[:B, :H]


def rnn_agent_forward(inputs, hidden_state, packed, *, H, A):
    """Single-step forward matching the original module's forward(inputs, hidden, t)."""
    q_seq, h = rnn_agent_forward_seq(inputs[None], hidden_state, packed, H=H, A=A)
    return q_seq[0], h


# ---------------------------------------------------------------------------
# Init + reference
# ---------------------------------------------------------------------------
def init_params(key, input_shape, hidden_dim, n_actions):
    """PyTorch-style uniform(-1/sqrt(fan_in), 1/sqrt(fan_in)) init.
    All weights stored transposed: (in_features, out_features)."""
    ks = jax.random.split(key, 8)

    def unif(k, shape, fan_in):
        bound = 1.0 / jnp.sqrt(jnp.float32(fan_in))
        return jax.random.uniform(k, shape, jnp.float32, -bound, bound)

    H = hidden_dim
    return {
        "w1": unif(ks[0], (input_shape, H), input_shape),
        "b1": unif(ks[1], (H,), input_shape),
        "w_ih": unif(ks[2], (H, 3 * H), H),
        "b_ih": unif(ks[3], (3 * H,), H),
        "w_hh": unif(ks[4], (H, 3 * H), H),
        "b_hh": unif(ks[5], (3 * H,), H),
        "w2": unif(ks[6], (H, n_actions), H),
        "b2": unif(ks[7], (n_actions,), H),
    }


def reference_forward_seq(inputs_seq, hidden_state, params):
    """Pure-JAX reference: per-step GRU rollout with the same bf16 weight/input/output
    rounding choices as the kernel (f32 accumulation, f32 hidden carry)."""
    H = params["w1"].shape[1]
    bf = jnp.bfloat16
    w1 = params["w1"].astype(bf)
    wih = params["w_ih"].astype(bf)
    whh = params["w_hh"].astype(bf)
    w2 = params["w2"].astype(bf)
    b1, bih, bhh, b2 = params["b1"], params["b_ih"], params["b_hh"], params["b2"]

    def mm(a, w):
        return jnp.dot(a.astype(bf), w, preferred_element_type=jnp.float32)

    h = hidden_state
    qs = []
    for t in range(inputs_seq.shape[0]):
        x = inputs_seq[t]
        x1 = jnp.maximum(mm(x, w1) + b1, 0.0)
        gi = mm(x1, wih) + bih
        gh = mm(h, whh) + bhh
        r = jax.nn.sigmoid(gi[:, :H] + gh[:, :H])
        z = jax.nn.sigmoid(gi[:, H:2 * H] + gh[:, H:2 * H])
        n = jnp.tanh(gi[:, 2 * H:] + r * gh[:, 2 * H:])
        h = (1.0 - z) * n + z * h
        q = mm(h, w2) + b2
        qs.append(q.astype(bf).astype(jnp.float32))   # kernel emits q in bf16
    return jnp.stack(qs, axis=0), h


# ---------------------------------------------------------------------------
# Main
# ---------------------------------------------------------------------------
if __name__ == "__main__":
    # Small config consistent with the module: B = bs * n_agents rows, T timesteps.
    input_shape = 16
    hidden_dim = 32
    n_actions = 8
    bs, n_agents = 2, 4
    B = bs * n_agents
    T = 8

    key = jax.random.PRNGKey(0)
    k_in, k_h, k_p = jax.random.split(key, 3)

    inputs_seq = jax.random.normal(k_in, (T, B, input_shape), jnp.float32)
    hidden0 = jax.random.normal(k_h, (B, hidden_dim), jnp.float32)
    params = init_params(k_p, input_shape, hidden_dim, n_actions)

    # Pack / bf16-cast weights ONCE, outside the jitted rollout.
    packed = pack_params(params, input_shape, hidden_dim, n_actions)

    # Fused multi-step rollout (weights resident in VMEM, h carried in scratch,
    # Tb timesteps per grid step).
    q_seq, h_final = rnn_agent_forward_seq(inputs_seq, hidden0, packed,
                                           H=hidden_dim, A=n_actions)
    q_seq, h_final = jax.block_until_ready((q_seq, h_final))

    q_ref, h_ref = reference_forward_seq(inputs_seq, hidden0, params)
    assert q_seq.shape == (T, B, n_actions) and h_final.shape == (B, hidden_dim)
    assert jnp.allclose(q_seq, q_ref, atol=2e-2, rtol=2e-2)
    assert jnp.allclose(h_final, h_ref, atol=1e-2, rtol=1e-2)

    # Single-step API (matches the original module's forward signature semantics).
    q1, h1 = rnn_agent_forward(inputs_seq[0], hidden0, packed,
                               H=hidden_dim, A=n_actions)
    q1, h1 = jax.block_until_ready((q1, h1))
    q1_ref, h1_ref = reference_forward_seq(inputs_seq[:1], hidden0, params)
    assert jnp.allclose(q1, q1_ref[0], atol=2e-2, rtol=2e-2)
    assert jnp.allclose(h1, h1_ref, atol=1e-2, rtol=1e-2)

    print("KERNEL_OK")
</pallas_src>

<mosaic_0001>
module attributes {stable_mosaic.version = 11 : i64} {
  func.func @rnn_agent_seq_kernel(%arg0: i32, %arg1: i32, %arg2: memref<8x8x16xbf16, #tpu.memory_space<vmem>>, %arg3: memref<8x128xf32, #tpu.memory_space<vmem>>, %arg4: memref<16x128xbf16, #tpu.memory_space<vmem>>, %arg5: memref<1x128xf32, #tpu.memory_space<vmem>>, %arg6: memref<256x512xbf16, #tpu.memory_space<vmem>>, %arg7: memref<1x512xf32, #tpu.memory_space<vmem>>, %arg8: memref<128x128xbf16, #tpu.memory_space<vmem>>, %arg9: memref<1x128xf32, #tpu.memory_space<vmem>>, %arg10: memref<8x8x128xbf16, #tpu.memory_space<vmem>>, %arg11: memref<8x128xf32, #tpu.memory_space<vmem>>, %arg12: memref<8x128xf32, #tpu.memory_space<vmem>>) attributes {dimension_semantics = [#tpu.dimension_semantics<parallel>, #tpu.dimension_semantics<arbitrary>], iteration_bounds = array<i64: 1, 1>, scalar_prefetch = 0 : i64, scratch_operands = 1 : i64, tpu.core_type = #tpu.core_type<tc>, window_params = [{transform_indices = @transform_0, window_bounds = array<i64: 8, 8, 16>}, {transform_indices = @transform_1, window_bounds = array<i64: 8, 128>}, {pipeline_mode = #tpu.pipeline_mode<synchronous>, transform_indices = @transform_2, window_bounds = array<i64: 16, 128>}, {pipeline_mode = #tpu.pipeline_mode<synchronous>, transform_indices = @transform_3, window_bounds = array<i64: 1, 128>}, {pipeline_mode = #tpu.pipeline_mode<synchronous>, transform_indices = @transform_4, window_bounds = array<i64: 256, 512>}, {pipeline_mode = #tpu.pipeline_mode<synchronous>, transform_indices = @transform_5, window_bounds = array<i64: 1, 512>}, {pipeline_mode = #tpu.pipeline_mode<synchronous>, transform_indices = @transform_6, window_bounds = array<i64: 128, 128>}, {pipeline_mode = #tpu.pipeline_mode<synchronous>, transform_indices = @transform_7, window_bounds = array<i64: 1, 128>}, {transform_indices = @transform_8, window_bounds = array<i64: 8, 8, 128>}, {transform_indices = @transform_9, window_bounds = array<i64: 8, 128>}]} {
    %c0_i32 = arith.constant 0 : i32
    %0 = arith.cmpi eq, %arg1, %c0_i32 : i32
    %1 = arith.extui %0 : i1 to i32
    %c0_i32_0 = arith.constant 0 : i32
    %2 = arith.cmpi ne, %1, %c0_i32_0 : i32
    scf.if %2 {
      %c0_106 = arith.constant 0 : index
      %c0_107 = arith.constant 0 : index
      %356 = vector.load %arg3[%c0_106, %c0_107] : memref<8x128xf32, #tpu.memory_space<vmem>>, vector<8x128xf32>
      %c0_108 = arith.constant 0 : index
      %c0_109 = arith.constant 0 : index
      %357 = vector.load %arg12[%c0_108, %c0_109] : memref<8x128xf32, #tpu.memory_space<vmem>>, vector<8x128xf32>
      tpu.vector_store %arg12[%c0_108, %c0_109], %356 {strides = array<i32>} : memref<8x128xf32, #tpu.memory_space<vmem>>, vector<8x128xf32>,
    } else {
    }
    %c0 = arith.constant 0 : index
    %c0_1 = arith.constant 0 : index
    %3 = vector.load %arg4[%c0, %c0_1] : memref<16x128xbf16, #tpu.memory_space<vmem>>, vector<16x128xbf16>
    %c0_2 = arith.constant 0 : index
    %c0_3 = arith.constant 0 : index
    %4 = vector.load %arg6[%c0_2, %c0_3] : memref<256x512xbf16, #tpu.memory_space<vmem>>, vector<256x512xbf16>
    %c0_4 = arith.constant 0 : index
    %c0_5 = arith.constant 0 : index
    %5 = vector.load %arg8[%c0_4, %c0_5] : memref<128x128xbf16, #tpu.memory_space<vmem>>, vector<128x128xbf16>
    %c0_6 = arith.constant 0 : index
    %c0_7 = arith.constant 0 : index
    %6 = vector.load %arg5[%c0_6, %c0_7] : memref<1x128xf32, #tpu.memory_space<vmem>>, vector<1x128xf32>
    %7 = vector.shape_cast %6 : vector<1x128xf32> to vector<1x128xf32>
    %8 = vector.broadcast %7 : vector<1x128xf32> to vector<8x128xf32>
    %c0_8 = arith.constant 0 : index
    %c0_9 = arith.constant 0 : index
    %9 = vector.load %arg7[%c0_8, %c0_9] : memref<1x512xf32, #tpu.memory_space<vmem>>, vector<1x512xf32>
    %10 = vector.shape_cast %9 : vector<1x512xf32> to vector<1x512xf32>
    %11 = vector.broadcast %10 : vector<1x512xf32> to vector<8x512xf32>
    %c0_10 = arith.constant 0 : index
    %c0_11 = arith.constant 0 : index
    %12 = vector.load %arg9[%c0_10, %c0_11] : memref<1x128xf32, #tpu.memory_space<vmem>>, vector<1x128xf32>
    %13 = vector.shape_cast %12 : vector<1x128xf32> to vector<1x128xf32>
    %14 = vector.broadcast %13 : vector<1x128xf32> to vector<8x128xf32>
    %c0_12 = arith.constant 0 : index
    %c0_13 = arith.constant 0 : index
    %15 = vector.load %arg12[%c0_12, %c0_13] : memref<8x128xf32, #tpu.memory_space<vmem>>, vector<8x128xf32>
    %c0_i32_14 = arith.constant 0 : i32
    %16 = arith.index_cast %c0_i32_14 : i32 to index
    %c0_15 = arith.constant 0 : index
    %c0_16 = arith.constant 0 : index
    %17 = vector.load %arg2[%16, %c0_15, %c0_16] : memref<8x8x16xbf16, #tpu.memory_space<vmem>>, vector<1x8x16xbf16>
    %18 = vector.shape_cast %17 : vector<1x8x16xbf16> to vector<8x16xbf16>
    %cst = arith.constant dense<0.000000e+00> : vector<8x128xf32>
    %19 = tpu.matmul %18, %3, %cst {dimension_numbers = #tpu.dot_dimension_numbers<[1], [0], [0], [1], [0, 0, 1, 1], [], []>} : vector<8x16xbf16>, vector<16x128xbf16>, vector<8x128xf32> -> vector<8x128xf32>
    %20 = arith.addf %19, %8 : vector<8x128xf32>
    %cst_17 = arith.constant 0.000000e+00 : f32
    %21 = vector.broadcast %cst_17 : f32 to vector<8x128xf32>
    %22 = arith.maximumf %20, %21 : vector<8x128xf32>
    %23 = arith.truncf %22 : vector<8x128xf32> to vector<8x128xbf16>
    %24 = arith.truncf %15 : vector<8x128xf32> to vector<8x128xbf16>
    %25 = tpu.concatenate %23, %24 in 1 : vector<8x128xbf16>, vector<8x128xbf16> -> vector<8x256xbf16>
    %cst_18 = arith.constant dense<0.000000e+00> : vector<8x512xf32>
    %26 = tpu.matmul %25, %4, %cst_18 {dimension_numbers = #tpu.dot_dimension_numbers<[1], [0], [0], [1], [0, 0, 1, 1], [], []>} : vector<8x256xbf16>, vector<256x512xbf16>, vector<8x512xf32> -> vector<8x512xf32>
    %27 = arith.addf %26, %11 : vector<8x512xf32>
    %28 = vector.extract_strided_slice %27 {offsets = [0, 0], sizes = [8, 128], strides = [1, 1]} : vector<8x512xf32> to vector<8x128xf32>
    %29 = arith.negf %28 : vector<8x128xf32>
    %30 = math.exp %29 : vector<8x128xf32>
    %cst_19 = arith.constant 1.000000e+00 : f32
    %31 = vector.broadcast %cst_19 : f32 to vector<8x128xf32>
    %32 = arith.addf %31, %30 : vector<8x128xf32>
    %33 = arith.divf %31, %32 : vector<8x128xf32>
    %34 = vector.extract_strided_slice %27 {offsets = [0, 128], sizes = [8, 128], strides = [1, 1]} : vector<8x512xf32> to vector<8x128xf32>
    %35 = arith.negf %34 : vector<8x128xf32>
    %36 = math.exp %35 : vector<8x128xf32>
    %cst_20 = arith.constant 1.000000e+00 : f32
    %37 = vector.broadcast %cst_20 : f32 to vector<8x128xf32>
    %38 = arith.addf %37, %36 : vector<8x128xf32>
    %39 = arith.divf %37, %38 : vector<8x128xf32>
    %40 = vector.extract_strided_slice %27 {offsets = [0, 256], sizes = [8, 128], strides = [1, 1]} : vector<8x512xf32> to vector<8x128xf32>
    %41 = vector.extract_strided_slice %27 {offsets = [0, 384], sizes = [8, 128], strides = [1, 1]} : vector<8x512xf32> to vector<8x128xf32>
    %42 = arith.mulf %33, %41 : vector<8x128xf32>
    %43 = arith.addf %40, %42 : vector<8x128xf32>
    %44 = math.tanh %43 : vector<8x128xf32>
    %cst_21 = arith.constant 1.000000e+00 : f32
    %45 = vector.broadcast %cst_21 : f32 to vector<8x128xf32>
    %46 = arith.subf %45, %39 : vector<8x128xf32>
    %47 = arith.mulf %46, %44 : vector<8x128xf32>
    %48 = arith.mulf %39, %15 : vector<8x128xf32>
    %49 = arith.addf %47, %48 : vector<8x128xf32>
    %50 = arith.truncf %49 : vector<8x128xf32> to vector<8x128xbf16>
    %cst_22 = arith.constant dense<0.000000e+00> : vector<8x128xf32>
    %51 = tpu.matmul %50, %5, %cst_22 {dimension_numbers = #tpu.dot_dimension_numbers<[1], [0], [0], [1], [0, 0, 1, 1], [], []>} : vector<8x128xbf16>, vector<128x128xbf16>, vector<8x128xf32> -> vector<8x128xf32>
    %52 = arith.addf %51, %14 : vector<8x128xf32>
    %53 = arith.truncf %52 : vector<8x128xf32> to vector<8x128xbf16>
    %54 = arith.index_cast %c0_i32_14 : i32 to index
    %c0_23 = arith.constant 0 : index
    %c0_24 = arith.constant 0 : index
    %55 = vector.load %arg10[%54, %c0_23, %c0_24] : memref<8x8x128xbf16, #tpu.memory_space<vmem>>, vector<1x8x128xbf16>
    %56 = vector.shape_cast %55 : vector<1x8x128xbf16> to vector<8x128xbf16>
    %57 = vector.shape_cast %53 : vector<8x128xbf16> to vector<1x8x128xbf16>
    tpu.vector_store %arg10[%54, %c0_23, %c0_24], %57 {strides = array<i32>} : memref<8x8x128xbf16, #tpu.memory_space<vmem>>, vector<1x8x128xbf16>,
    %c1_i32 = arith.constant 1 : i32
    %58 = arith.index_cast %c1_i32 : i32 to index
    %c0_25 = arith.constant 0 : index
    %c0_26 = arith.constant 0 : index
    %59 = vector.load %arg2[%58, %c0_25, %c0_26] : memref<8x8x16xbf16, #tpu.memory_space<vmem>>, vector<1x8x16xbf16>
    %60 = vector.shape_cast %59 : vector<1x8x16xbf16> to vector<8x16xbf16>
    %cst_27 = arith.constant dense<0.000000e+00> : vector<8x128xf32>
    %61 = tpu.matmul %60, %3, %cst_27 {dimension_numbers = #tpu.dot_dimension_numbers<[1], [0], [0], [1], [0, 0, 1, 1], [], []>} : vector<8x16xbf16>, vector<16x128xbf16>, vector<8x128xf32> -> vector<8x128xf32>
    %62 = arith.addf %61, %8 : vector<8x128xf32>
    %cst_28 = arith.constant 0.000000e+00 : f32
    %63 = vector.broadcast %cst_28 : f32 to vector<8x128xf32>
    %64 = arith.maximumf %62, %63 : vector<8x128xf32>
    %65 = arith.truncf %64 : vector<8x128xf32> to vector<8x128xbf16>
    %66 = arith.truncf %49 : vector<8x128xf32> to vector<8x128xbf16>
    %67 = tpu.concatenate %65, %66 in 1 : vector<8x128xbf16>, vector<8x128xbf16> -> vector<8x256xbf16>
    %cst_29 = arith.constant dense<0.000000e+00> : vector<8x512xf32>
    %68 = tpu.matmul %67, %4, %cst_29 {dimension_numbers = #tpu.dot_dimension_numbers<[1], [0], [0], [1], [0, 0, 1, 1], [], []>} : vector<8x256xbf16>, vector<256x512xbf16>, vector<8x512xf32> -> vector<8x512xf32>
    %69 = arith.addf %68, %11 : vector<8x512xf32>
    %70 = vector.extract_strided_slice %69 {offsets = [0, 0], sizes = [8, 128], strides = [1, 1]} : vector<8x512xf32> to vector<8x128xf32>
    %71 = arith.negf %70 : vector<8x128xf32>
    %72 = math.exp %71 : vector<8x128xf32>
    %cst_30 = arith.constant 1.000000e+00 : f32
    %73 = vector.broadcast %cst_30 : f32 to vector<8x128xf32>
    %74 = arith.addf %73, %72 : vector<8x128xf32>
    %75 = arith.divf %73, %74 : vector<8x128xf32>
    %76 = vector.extract_strided_slice %69 {offsets = [0, 128], sizes = [8, 128], strides = [1, 1]} : vector<8x512xf32> to vector<8x128xf32>
    %77 = arith.negf %76 : vector<8x128xf32>
    %78 = math.exp %77 : vector<8x128xf32>
    %cst_31 = arith.constant 1.000000e+00 : f32
    %79 = vector.broadcast %cst_31 : f32 to vector<8x128xf32>
    %80 = arith.addf %79, %78 : vector<8x128xf32>
    %81 = arith.divf %79, %80 : vector<8x128xf32>
    %82 = vector.extract_strided_slice %69 {offsets = [0, 256], sizes = [8, 128], strides = [1, 1]} : vector<8x512xf32> to vector<8x128xf32>
    %83 = vector.extract_strided_slice %69 {offsets = [0, 384], sizes = [8, 128], strides = [1, 1]} : vector<8x512xf32> to vector<8x128xf32>
    %84 = arith.mulf %75, %83 : vector<8x128xf32>
    %85 = arith.addf %82, %84 : vector<8x128xf32>
    %86 = math.tanh %85 : vector<8x128xf32>
    %cst_32 = arith.constant 1.000000e+00 : f32
    %87 = vector.broadcast %cst_32 : f32 to vector<8x128xf32>
    %88 = arith.subf %87, %81 : vector<8x128xf32>
    %89 = arith.mulf %88, %86 : vector<8x128xf32>
    %90 = arith.mulf %81, %49 : vector<8x128xf32>
    %91 = arith.addf %89, %90 : vector<8x128xf32>
    %92 = arith.truncf %91 : vector<8x128xf32> to vector<8x128xbf16>
    %cst_33 = arith.constant dense<0.000000e+00> : vector<8x128xf32>
    %93 = tpu.matmul %92, %5, %cst_33 {dimension_numbers = #tpu.dot_dimension_numbers<[1], [0], [0], [1], [0, 0, 1, 1], [], []>} : vector<8x128xbf16>, vector<128x128xbf16>, vector<8x128xf32> -> vector<8x128xf32>
    %94 = arith.addf %93, %14 : vector<8x128xf32>
    %95 = arith.truncf %94 : vector<8x128xf32> to vector<8x128xbf16>
    %96 = arith.index_cast %c1_i32 : i32 to index
    %c0_34 = arith.constant 0 : index
    %c0_35 = arith.constant 0 : index
    %97 = vector.load %arg10[%96, %c0_34, %c0_35] : memref<8x8x128xbf16, #tpu.memory_space<vmem>>, vector<1x8x128xbf16>
    %98 = vector.shape_cast %97 : vector<1x8x128xbf16> to vector<8x128xbf16>
    %99 = vector.shape_cast %95 : vector<8x128xbf16> to vector<1x8x128xbf16>
    tpu.vector_store %arg10[%96, %c0_34, %c0_35], %99 {strides = array<i32>} : memref<8x8x128xbf16, #tpu.memory_space<vmem>>, vector<1x8x128xbf16>,
    %c2_i32 = arith.constant 2 : i32
    %100 = arith.index_cast %c2_i32 : i32 to index
    %c0_36 = arith.constant 0 : index
    %c0_37 = arith.constant 0 : index
    %101 = vector.load %arg2[%100, %c0_36, %c0_37] : memref<8x8x16xbf16, #tpu.memory_space<vmem>>, vector<1x8x16xbf16>
    %102 = vector.shape_cast %101 : vector<1x8x16xbf16> to vector<8x16xbf16>
    %cst_38 = arith.constant dense<0.000000e+00> : vector<8x128xf32>
    %103 = tpu.matmul %102, %3, %cst_38 {dimension_numbers = #tpu.dot_dimension_numbers<[1], [0], [0], [1], [0, 0, 1, 1], [], []>} : vector<8x16xbf16>, vector<16x128xbf16>, vector<8x128xf32> -> vector<8x128xf32>
    %104 = arith.addf %103, %8 : vector<8x128xf32>
    %cst_39 = arith.constant 0.000000e+00 : f32
    %105 = vector.broadcast %cst_39 : f32 to vector<8x128xf32>
    %106 = arith.maximumf %104, %105 : vector<8x128xf32>
    %107 = arith.truncf %106 : vector<8x128xf32> to vector<8x128xbf16>
    %108 = arith.truncf %91 : vector<8x128xf32> to vector<8x128xbf16>
    %109 = tpu.concatenate %107, %108 in 1 : vector<8x128xbf16>, vector<8x128xbf16> -> vector<8x256xbf16>
    %cst_40 = arith.constant dense<0.000000e+00> : vector<8x512xf32>
    %110 = tpu.matmul %109, %4, %cst_40 {dimension_numbers = #tpu.dot_dimension_numbers<[1], [0], [0], [1], [0, 0, 1, 1], [], []>} : vector<8x256xbf16>, vector<256x512xbf16>, vector<8x512xf32> -> vector<8x512xf32>
    %111 = arith.addf %110, %11 : vector<8x512xf32>
    %112 = vector.extract_strided_slice %111 {offsets = [0, 0], sizes = [8, 128], strides = [1, 1]} : vector<8x512xf32> to vector<8x128xf32>
    %113 = arith.negf %112 : vector<8x128xf32>
    %114 = math.exp %113 : vector<8x128xf32>
    %cst_41 = arith.constant 1.000000e+00 : f32
    %115 = vector.broadcast %cst_41 : f32 to vector<8x128xf32>
    %116 = arith.addf %115, %114 : vector<8x128xf32>
    %117 = arith.divf %115, %116 : vector<8x128xf32>
    %118 = vector.extract_strided_slice %111 {offsets = [0, 128], sizes = [8, 128], strides = [1, 1]} : vector<8x512xf32> to vector<8x128xf32>
    %119 = arith.negf %118 : vector<8x128xf32>
    %120 = math.exp %119 : vector<8x128xf32>
    %cst_42 = arith.constant 1.000000e+00 : f32
    %121 = vector.broadcast %cst_42 : f32 to vector<8x128xf32>
    %122 = arith.addf %121, %120 : vector<8x128xf32>
    %123 = arith.divf %121, %122 : vector<8x128xf32>
    %124 = vector.extract_strided_slice %111 {offsets = [0, 256], sizes = [8, 128], strides = [1, 1]} : vector<8x512xf32> to vector<8x128xf32>
    %125 = vector.extract_strided_slice %111 {offsets = [0, 384], sizes = [8, 128], strides = [1, 1]} : vector<8x512xf32> to vector<8x128xf32>
    %126 = arith.mulf %117, %125 : vector<8x128xf32>
    %127 = arith.addf %124, %126 : vector<8x128xf32>
    %128 = math.tanh %127 : vector<8x128xf32>
    %cst_43 = arith.constant 1.000000e+00 : f32
    %129 = vector.broadcast %cst_43 : f32 to vector<8x128xf32>
    %130 = arith.subf %129, %123 : vector<8x128xf32>
    %131 = arith.mulf %130, %128 : vector<8x128xf32>
    %132 = arith.mulf %123, %91 : vector<8x128xf32>
    %133 = arith.addf %131, %132 : vector<8x128xf32>
    %134 = arith.truncf %133 : vector<8x128xf32> to vector<8x128xbf16>
    %cst_44 = arith.constant dense<0.000000e+00> : vector<8x128xf32>
    %135 = tpu.matmul %134, %5, %cst_44 {dimension_numbers = #tpu.dot_dimension_numbers<[1], [0], [0], [1], [0, 0, 1, 1], [], []>} : vector<8x128xbf16>, vector<128x128xbf16>, vector<8x128xf32> -> vector<8x128xf32>
    %136 = arith.addf %135, %14 : vector<8x128xf32>
    %137 = arith.truncf %136 : vector<8x128xf32> to vector<8x128xbf16>
    %138 = arith.index_cast %c2_i32 : i32 to index
    %c0_45 = arith.constant 0 : index
    %c0_46 = arith.constant 0 : index
    %139 = vector.load %arg10[%138, %c0_45, %c0_46] : memref<8x8x128xbf16, #tpu.memory_space<vmem>>, vector<1x8x128xbf16>
    %140 = vector.shape_cast %139 : vector<1x8x128xbf16> to vector<8x128xbf16>
    %141 = vector.shape_cast %137 : vector<8x128xbf16> to vector<1x8x128xbf16>
    tpu.vector_store %arg10[%138, %c0_45, %c0_46], %141 {strides = array<i32>} : memref<8x8x128xbf16, #tpu.memory_space<vmem>>, vector<1x8x128xbf16>,
    %c3_i32 = arith.constant 3 : i32
    %142 = arith.index_cast %c3_i32 : i32 to index
    %c0_47 = arith.constant 0 : index
    %c0_48 = arith.constant 0 : index
    %143 = vector.load %arg2[%142, %c0_47, %c0_48] : memref<8x8x16xbf16, #tpu.memory_space<vmem>>, vector<1x8x16xbf16>
    %144 = vector.shape_cast %143 : vector<1x8x16xbf16> to vector<8x16xbf16>
    %cst_49 = arith.constant dense<0.000000e+00> : vector<8x128xf32>
    %145 = tpu.matmul %144, %3, %cst_49 {dimension_numbers = #tpu.dot_dimension_numbers<[1], [0], [0], [1], [0, 0, 1, 1], [], []>} : vector<8x16xbf16>, vector<16x128xbf16>, vector<8x128xf32> -> vector<8x128xf32>
    %146 = arith.addf %145, %8 : vector<8x128xf32>
    %cst_50 = arith.constant 0.000000e+00 : f32
    %147 = vector.broadcast %cst_50 : f32 to vector<8x128xf32>
    %148 = arith.maximumf %146, %147 : vector<8x128xf32>
    %149 = arith.truncf %148 : vector<8x128xf32> to vector<8x128xbf16>
    %150 = arith.truncf %133 : vector<8x128xf32> to vector<8x128xbf16>
    %151 = tpu.concatenate %149, %150 in 1 : vector<8x128xbf16>, vector<8x128xbf16> -> vector<8x256xbf16>
    %cst_51 = arith.constant dense<0.000000e+00> : vector<8x512xf32>
    %152 = tpu.matmul %151, %4, %cst_51 {dimension_numbers = #tpu.dot_dimension_numbers<[1], [0], [0], [1], [0, 0, 1, 1], [], []>} : vector<8x256xbf16>, vector<256x512xbf16>, vector<8x512xf32> -> vector<8x512xf32>
    %153 = arith.addf %152, %11 : vector<8x512xf32>
    %154 = vector.extract_strided_slice %153 {offsets = [0, 0], sizes = [8, 128], strides = [1, 1]} : vector<8x512xf32> to vector<8x128xf32>
    %155 = arith.negf %154 : vector<8x128xf32>
    %156 = math.exp %155 : vector<8x128xf32>
    %cst_52 = arith.constant 1.000000e+00 : f32
    %157 = vector.broadcast %cst_52 : f32 to vector<8x128xf32>
    %158 = arith.addf %157, %156 : vector<8x128xf32>
    %159 = arith.divf %157, %158 : vector<8x128xf32>
    %160 = vector.extract_strided_slice %153 {offsets = [0, 128], sizes = [8, 128], strides = [1, 1]} : vector<8x512xf32> to vector<8x128xf32>
    %161 = arith.negf %160 : vector<8x128xf32>
    %162 = math.exp %161 : vector<8x128xf32>
    %cst_53 = arith.constant 1.000000e+00 : f32
    %163 = vector.broadcast %cst_53 : f32 to vector<8x128xf32>
    %164 = arith.addf %163, %162 : vector<8x128xf32>
    %165 = arith.divf %163, %164 : vector<8x128xf32>
    %166 = vector.extract_strided_slice %153 {offsets = [0, 256], sizes = [8, 128], strides = [1, 1]} : vector<8x512xf32> to vector<8x128xf32>
    %167 = vector.extract_strided_slice %153 {offsets = [0, 384], sizes = [8, 128], strides = [1, 1]} : vector<8x512xf32> to vector<8x128xf32>
    %168 = arith.mulf %159, %167 : vector<8x128xf32>
    %169 = arith.addf %166, %168 : vector<8x128xf32>
    %170 = math.tanh %169 : vector<8x128xf32>
    %cst_54 = arith.constant 1.000000e+00 : f32
    %171 = vector.broadcast %cst_54 : f32 to vector<8x128xf32>
    %172 = arith.subf %171, %165 : vector<8x128xf32>
    %173 = arith.mulf %172, %170 : vector<8x128xf32>
    %174 = arith.mulf %165, %133 : vector<8x128xf32>
    %175 = arith.addf %173, %174 : vector<8x128xf32>
    %176 = arith.truncf %175 : vector<8x128xf32> to vector<8x128xbf16>
    %cst_55 = arith.constant dense<0.000000e+00> : vector<8x128xf32>
    %177 = tpu.matmul %176, %5, %cst_55 {dimension_numbers = #tpu.dot_dimension_numbers<[1], [0], [0], [1], [0, 0, 1, 1], [], []>} : vector<8x128xbf16>, vector<128x128xbf16>, vector<8x128xf32> -> vector<8x128xf32>
    %178 = arith.addf %177, %14 : vector<8x128xf32>
    %179 = arith.truncf %178 : vector<8x128xf32> to vector<8x128xbf16>
    %180 = arith.index_cast %c3_i32 : i32 to index
    %c0_56 = arith.constant 0 : index
    %c0_57 = arith.constant 0 : index
    %181 = vector.load %arg10[%180, %c0_56, %c0_57] : memref<8x8x128xbf16, #tpu.memory_space<vmem>>, vector<1x8x128xbf16>
    %182 = vector.shape_cast %181 : vector<1x8x128xbf16> to vector<8x128xbf16>
    %183 = vector.shape_cast %179 : vector<8x128xbf16> to vector<1x8x128xbf16>
    tpu.vector_store %arg10[%180, %c0_56, %c0_57], %183 {strides = array<i32>} : memref<8x8x128xbf16, #tpu.memory_space<vmem>>, vector<1x8x128xbf16>,
    %c4_i32 = arith.constant 4 : i32
    %184 = arith.index_cast %c4_i32 : i32 to index
    %c0_58 = arith.constant 0 : index
    %c0_59 = arith.constant 0 : index
    %185 = vector.load %arg2[%184, %c0_58, %c0_59] : memref<8x8x16xbf16, #tpu.memory_space<vmem>>, vector<1x8x16xbf16>
    %186 = vector.shape_cast %185 : vector<1x8x16xbf16> to vector<8x16xbf16>
    %cst_60 = arith.constant dense<0.000000e+00> : vector<8x128xf32>
    %187 = tpu.matmul %186, %3, %cst_60 {dimension_numbers = #tpu.dot_dimension_numbers<[1], [0], [0], [1], [0, 0, 1, 1], [], []>} : vector<8x16xbf16>, vector<16x128xbf16>, vector<8x128xf32> -> vector<8x128xf32>
    %188 = arith.addf %187, %8 : vector<8x128xf32>
    %cst_61 = arith.constant 0.000000e+00 : f32
    %189 = vector.broadcast %cst_61 : f32 to vector<8x128xf32>
    %190 = arith.maximumf %188, %189 : vector<8x128xf32>
    %191 = arith.truncf %190 : vector<8x128xf32> to vector<8x128xbf16>
    %192 = arith.truncf %175 : vector<8x128xf32> to vector<8x128xbf16>
    %193 = tpu.concatenate %191, %192 in 1 : vector<8x128xbf16>, vector<8x128xbf16> -> vector<8x256xbf16>
    %cst_62 = arith.constant dense<0.000000e+00> : vector<8x512xf32>
    %194 = tpu.matmul %193, %4, %cst_62 {dimension_numbers = #tpu.dot_dimension_numbers<[1], [0], [0], [1], [0, 0, 1, 1], [], []>} : vector<8x256xbf16>, vector<256x512xbf16>, vector<8x512xf32> -> vector<8x512xf32>
    %195 = arith.addf %194, %11 : vector<8x512xf32>
    %196 = vector.extract_strided_slice %195 {offsets = [0, 0], sizes = [8, 128], strides = [1, 1]} : vector<8x512xf32> to vector<8x128xf32>
    %197 = arith.negf %196 : vector<8x128xf32>
    %198 = math.exp %197 : vector<8x128xf32>
    %cst_63 = arith.constant 1.000000e+00 : f32
    %199 = vector.broadcast %cst_63 : f32 to vector<8x128xf32>
    %200 = arith.addf %199, %198 : vector<8x128xf32>
    %201 = arith.divf %199, %200 : vector<8x128xf32>
    %202 = vector.extract_strided_slice %195 {offsets = [0, 128], sizes = [8, 128], strides = [1, 1]} : vector<8x512xf32> to vector<8x128xf32>
    %203 = arith.negf %202 : vector<8x128xf32>
    %204 = math.exp %203 : vector<8x128xf32>
    %cst_64 = arith.constant 1.000000e+00 : f32
    %205 = vector.broadcast %cst_64 : f32 to vector<8x128xf32>
    %206 = arith.addf %205, %204 : vector<8x128xf32>
    %207 = arith.divf %205, %206 : vector<8x128xf32>
    %208 = vector.extract_strided_slice %195 {offsets = [0, 256], sizes = [8, 128], strides = [1, 1]} : vector<8x512xf32> to vector<8x128xf32>
    %209 = vector.extract_strided_slice %195 {offsets = [0, 384], sizes = [8, 128], strides = [1, 1]} : vector<8x512xf32> to vector<8x128xf32>
    %210 = arith.mulf %201, %209 : vector<8x128xf32>
    %211 = arith.addf %208, %210 : vector<8x128xf32>
    %212 = math.tanh %211 : vector<8x128xf32>
    %cst_65 = arith.constant 1.000000e+00 : f32
    %213 = vector.broadcast %cst_65 : f32 to vector<8x128xf32>
    %214 = arith.subf %213, %207 : vector<8x128xf32>
    %215 = arith.mulf %214, %212 : vector<8x128xf32>
    %216 = arith.mulf %207, %175 : vector<8x128xf32>
    %217 = arith.addf %215, %216 : vector<8x128xf32>
    %218 = arith.truncf %217 : vector<8x128xf32> to vector<8x128xbf16>
    %cst_66 = arith.constant dense<0.000000e+00> : vector<8x128xf32>
    %219 = tpu.matmul %218, %5, %cst_66 {dimension_numbers = #tpu.dot_dimension_numbers<[1], [0], [0], [1], [0, 0, 1, 1], [], []>} : vector<8x128xbf16>, vector<128x128xbf16>, vector<8x128xf32> -> vector<8x128xf32>
    %220 = arith.addf %219, %14 : vector<8x128xf32>
    %221 = arith.truncf %220 : vector<8x128xf32> to vector<8x128xbf16>
    %222 = arith.index_cast %c4_i32 : i32 to index
    %c0_67 = arith.constant 0 : index
    %c0_68 = arith.constant 0 : index
    %223 = vector.load %arg10[%222, %c0_67, %c0_68] : memref<8x8x128xbf16, #tpu.memory_space<vmem>>, vector<1x8x128xbf16>
    %224 = vector.shape_cast %223 : vector<1x8x128xbf16> to vector<8x128xbf16>
    %225 = vector.shape_cast %221 : vector<8x128xbf16> to vector<1x8x128xbf16>
    tpu.vector_store %arg10[%222, %c0_67, %c0_68], %225 {strides = array<i32>} : memref<8x8x128xbf16, #tpu.memory_space<vmem>>, vector<1x8x128xbf16>,
    %c5_i32 = arith.constant 5 : i32
    %226 = arith.index_cast %c5_i32 : i32 to index
    %c0_69 = arith.constant 0 : index
    %c0_70 = arith.constant 0 : index
    %227 = vector.load %arg2[%226, %c0_69, %c0_70] : memref<8x8x16xbf16, #tpu.memory_space<vmem>>, vector<1x8x16xbf16>
    %228 = vector.shape_cast %227 : vector<1x8x16xbf16> to vector<8x16xbf16>
    %cst_71 = arith.constant dense<0.000000e+00> : vector<8x128xf32>
    %229 = tpu.matmul %228, %3, %cst_71 {dimension_numbers = #tpu.dot_dimension_numbers<[1], [0], [0], [1], [0, 0, 1, 1], [], []>} : vector<8x16xbf16>, vector<16x128xbf16>, vector<8x128xf32> -> vector<8x128xf32>
    %230 = arith.addf %229, %8 : vector<8x128xf32>
    %cst_72 = arith.constant 0.000000e+00 : f32
    %231 = vector.broadcast %cst_72 : f32 to vector<8x128xf32>
    %232 = arith.maximumf %230, %231 : vector<8x128xf32>
    %233 = arith.truncf %232 : vector<8x128xf32> to vector<8x128xbf16>
    %234 = arith.truncf %217 : vector<8x128xf32> to vector<8x128xbf16>
    %235 = tpu.concatenate %233, %234 in 1 : vector<8x128xbf16>, vector<8x128xbf16> -> vector<8x256xbf16>
    %cst_73 = arith.constant dense<0.000000e+00> : vector<8x512xf32>
    %236 = tpu.matmul %235, %4, %cst_73 {dimension_numbers = #tpu.dot_dimension_numbers<[1], [0], [0], [1], [0, 0, 1, 1], [], []>} : vector<8x256xbf16>, vector<256x512xbf16>, vector<8x512xf32> -> vector<8x512xf32>
    %237 = arith.addf %236, %11 : vector<8x512xf32>
    %238 = vector.extract_strided_slice %237 {offsets = [0, 0], sizes = [8, 128], strides = [1, 1]} : vector<8x512xf32> to vector<8x128xf32>
    %239 = arith.negf %238 : vector<8x128xf32>
    %240 = math.exp %239 : vector<8x128xf32>
    %cst_74 = arith.constant 1.000000e+00 : f32
    %241 = vector.broadcast %cst_74 : f32 to vector<8x128xf32>
    %242 = arith.addf %241, %240 : vector<8x128xf32>
    %243 = arith.divf %241, %242 : vector<8x128xf32>
    %244 = vector.extract_strided_slice %237 {offsets = [0, 128], sizes = [8, 128], strides = [1, 1]} : vector<8x512xf32> to vector<8x128xf32>
    %245 = arith.negf %244 : vector<8x128xf32>
    %246 = math.exp %245 : vector<8x128xf32>
    %cst_75 = arith.constant 1.000000e+00 : f32
    %247 = vector.broadcast %cst_75 : f32 to vector<8x128xf32>
    %248 = arith.addf %247, %246 : vector<8x128xf32>
    %249 = arith.divf %247, %248 : vector<8x128xf32>
    %250 = vector.extract_strided_slice %237 {offsets = [0, 256], sizes = [8, 128], strides = [1, 1]} : vector<8x512xf32> to vector<8x128xf32>
    %251 = vector.extract_strided_slice %237 {offsets = [0, 384], sizes = [8, 128], strides = [1, 1]} : vector<8x512xf32> to vector<8x128xf32>
    %252 = arith.mulf %243, %251 : vector<8x128xf32>
    %253 = arith.addf %250, %252 : vector<8x128xf32>
    %254 = math.tanh %253 : vector<8x128xf32>
    %cst_76 = arith.constant 1.000000e+00 : f32
    %255 = vector.broadcast %cst_76 : f32 to vector<8x128xf32>
    %256 = arith.subf %255, %249 : vector<8x128xf32>
    %257 = arith.mulf %256, %254 : vector<8x128xf32>
    %258 = arith.mulf %249, %217 : vector<8x128xf32>
    %259 = arith.addf %257, %258 : vector<8x128xf32>
    %260 = arith.truncf %259 : vector<8x128xf32> to vector<8x128xbf16>
    %cst_77 = arith.constant dense<0.000000e+00> : vector<8x128xf32>
    %261 = tpu.matmul %260, %5, %cst_77 {dimension_numbers = #tpu.dot_dimension_numbers<[1], [0], [0], [1], [0, 0, 1, 1], [], []>} : vector<8x128xbf16>, vector<128x128xbf16>, vector<8x128xf32> -> vector<8x128xf32>
    %262 = arith.addf %261, %14 : vector<8x128xf32>
    %263 = arith.truncf %262 : vector<8x128xf32> to vector<8x128xbf16>
    %264 = arith.index_cast %c5_i32 : i32 to index
    %c0_78 = arith.constant 0 : index
    %c0_79 = arith.constant 0 : index
    %265 = vector.load %arg10[%264, %c0_78, %c0_79] : memref<8x8x128xbf16, #tpu.memory_space<vmem>>, vector<1x8x128xbf16>
    %266 = vector.shape_cast %265 : vector<1x8x128xbf16> to vector<8x128xbf16>
    %267 = vector.shape_cast %263 : vector<8x128xbf16> to vector<1x8x128xbf16>
    tpu.vector_store %arg10[%264, %c0_78, %c0_79], %267 {strides = array<i32>} : memref<8x8x128xbf16, #tpu.memory_space<vmem>>, vector<1x8x128xbf16>,
    %c6_i32 = arith.constant 6 : i32
    %268 = arith.index_cast %c6_i32 : i32 to index
    %c0_80 = arith.constant 0 : index
    %c0_81 = arith.constant 0 : index
    %269 = vector.load %arg2[%268, %c0_80, %c0_81] : memref<8x8x16xbf16, #tpu.memory_space<vmem>>, vector<1x8x16xbf16>
    %270 = vector.shape_cast %269 : vector<1x8x16xbf16> to vector<8x16xbf16>
    %cst_82 = arith.constant dense<0.000000e+00> : vector<8x128xf32>
    %271 = tpu.matmul %270, %3, %cst_82 {dimension_numbers = #tpu.dot_dimension_numbers<[1], [0], [0], [1], [0, 0, 1, 1], [], []>} : vector<8x16xbf16>, vector<16x128xbf16>, vector<8x128xf32> -> vector<8x128xf32>
    %272 = arith.addf %271, %8 : vector<8x128xf32>
    %cst_83 = arith.constant 0.000000e+00 : f32
    %273 = vector.broadcast %cst_83 : f32 to vector<8x128xf32>
    %274 = arith.maximumf %272, %273 : vector<8x128xf32>
    %275 = arith.truncf %274 : vector<8x128xf32> to vector<8x128xbf16>
    %276 = arith.truncf %259 : vector<8x128xf32> to vector<8x128xbf16>
    %277 = tpu.concatenate %275, %276 in 1 : vector<8x128xbf16>, vector<8x128xbf16> -> vector<8x256xbf16>
    %cst_84 = arith.constant dense<0.000000e+00> : vector<8x512xf32>
    %278 = tpu.matmul %277, %4, %cst_84 {dimension_numbers = #tpu.dot_dimension_numbers<[1], [0], [0], [1], [0, 0, 1, 1], [], []>} : vector<8x256xbf16>, vector<256x512xbf16>, vector<8x512xf32> -> vector<8x512xf32>
    %279 = arith.addf %278, %11 : vector<8x512xf32>
    %280 = vector.extract_strided_slice %279 {offsets = [0, 0], sizes = [8, 128], strides = [1, 1]} : vector<8x512xf32> to vector<8x128xf32>
    %281 = arith.negf %280 : vector<8x128xf32>
    %282 = math.exp %281 : vector<8x128xf32>
    %cst_85 = arith.constant 1.000000e+00 : f32
    %283 = vector.broadcast %cst_85 : f32 to vector<8x128xf32>
    %284 = arith.addf %283, %282 : vector<8x128xf32>
    %285 = arith.divf %283, %284 : vector<8x128xf32>
    %286 = vector.extract_strided_slice %279 {offsets = [0, 128], sizes = [8, 128], strides = [1, 1]} : vector<8x512xf32> to vector<8x128xf32>
    %287 = arith.negf %286 : vector<8x128xf32>
    %288 = math.exp %287 : vector<8x128xf32>
    %cst_86 = arith.constant 1.000000e+00 : f32
    %289 = vector.broadcast %cst_86 : f32 to vector<8x128xf32>
    %290 = arith.addf %289, %288 : vector<8x128xf32>
    %291 = arith.divf %289, %290 : vector<8x128xf32>
    %292 = vector.extract_strided_slice %279 {offsets = [0, 256], sizes = [8, 128], strides = [1, 1]} : vector<8x512xf32> to vector<8x128xf32>
    %293 = vector.extract_strided_slice %279 {offsets = [0, 384], sizes = [8, 128], strides = [1, 1]} : vector<8x512xf32> to vector<8x128xf32>
    %294 = arith.mulf %285, %293 : vector<8x128xf32>
    %295 = arith.addf %292, %294 : vector<8x128xf32>
    %296 = math.tanh %295 : vector<8x128xf32>
    %cst_87 = arith.constant 1.000000e+00 : f32
    %297 = vector.broadcast %cst_87 : f32 to vector<8x128xf32>
    %298 = arith.subf %297, %291 : vector<8x128xf32>
    %299 = arith.mulf %298, %296 : vector<8x128xf32>
    %300 = arith.mulf %291, %259 : vector<8x128xf32>
    %301 = arith.addf %299, %300 : vector<8x128xf32>
    %302 = arith.truncf %301 : vector<8x128xf32> to vector<8x128xbf16>
    %cst_88 = arith.constant dense<0.000000e+00> : vector<8x128xf32>
    %303 = tpu.matmul %302, %5, %cst_88 {dimension_numbers = #tpu.dot_dimension_numbers<[1], [0], [0], [1], [0, 0, 1, 1], [], []>} : vector<8x128xbf16>, vector<128x128xbf16>, vector<8x128xf32> -> vector<8x128xf32>
    %304 = arith.addf %303, %14 : vector<8x128xf32>
    %305 = arith.truncf %304 : vector<8x128xf32> to vector<8x128xbf16>
    %306 = arith.index_cast %c6_i32 : i32 to index
    %c0_89 = arith.constant 0 : index
    %c0_90 = arith.constant 0 : index
    %307 = vector.load %arg10[%306, %c0_89, %c0_90] : memref<8x8x128xbf16, #tpu.memory_space<vmem>>, vector<1x8x128xbf16>
    %308 = vector.shape_cast %307 : vector<1x8x128xbf16> to vector<8x128xbf16>
    %309 = vector.shape_cast %305 : vector<8x128xbf16> to vector<1x8x128xbf16>
    tpu.vector_store %arg10[%306, %c0_89, %c0_90], %309 {strides = array<i32>} : memref<8x8x128xbf16, #tpu.memory_space<vmem>>, vector<1x8x128xbf16>,
    %c7_i32 = arith.constant 7 : i32
    %310 = arith.index_cast %c7_i32 : i32 to index
    %c0_91 = arith.constant 0 : index
    %c0_92 = arith.constant 0 : index
    %311 = vector.load %arg2[%310, %c0_91, %c0_92] : memref<8x8x16xbf16, #tpu.memory_space<vmem>>, vector<1x8x16xbf16>
    %312 = vector.shape_cast %311 : vector<1x8x16xbf16> to vector<8x16xbf16>
    %cst_93 = arith.constant dense<0.000000e+00> : vector<8x128xf32>
    %313 = tpu.matmul %312, %3, %cst_93 {dimension_numbers = #tpu.dot_dimension_numbers<[1], [0], [0], [1], [0, 0, 1, 1], [], []>} : vector<8x16xbf16>, vector<16x128xbf16>, vector<8x128xf32> -> vector<8x128xf32>
    %314 = arith.addf %313, %8 : vector<8x128xf32>
    %cst_94 = arith.constant 0.000000e+00 : f32
    %315 = vector.broadcast %cst_94 : f32 to vector<8x128xf32>
    %316 = arith.maximumf %314, %315 : vector<8x128xf32>
    %317 = arith.truncf %316 : vector<8x128xf32> to vector<8x128xbf16>
    %318 = arith.truncf %301 : vector<8x128xf32> to vector<8x128xbf16>
    %319 = tpu.concatenate %317, %318 in 1 : vector<8x128xbf16>, vector<8x128xbf16> -> vector<8x256xbf16>
    %cst_95 = arith.constant dense<0.000000e+00> : vector<8x512xf32>
    %320 = tpu.matmul %319, %4, %cst_95 {dimension_numbers = #tpu.dot_dimension_numbers<[1], [0], [0], [1], [0, 0, 1, 1], [], []>} : vector<8x256xbf16>, vector<256x512xbf16>, vector<8x512xf32> -> vector<8x512xf32>
    %321 = arith.addf %320, %11 : vector<8x512xf32>
    %322 = vector.extract_strided_slice %321 {offsets = [0, 0], sizes = [8, 128], strides = [1, 1]} : vector<8x512xf32> to vector<8x128xf32>
    %323 = arith.negf %322 : vector<8x128xf32>
    %324 = math.exp %323 : vector<8x128xf32>
    %cst_96 = arith.constant 1.000000e+00 : f32
    %325 = vector.broadcast %cst_96 : f32 to vector<8x128xf32>
    %326 = arith.addf %325, %324 : vector<8x128xf32>
    %327 = arith.divf %325, %326 : vector<8x128xf32>
    %328 = vector.extract_strided_slice %321 {offsets = [0, 128], sizes = [8, 128], strides = [1, 1]} : vector<8x512xf32> to vector<8x128xf32>
    %329 = arith.negf %328 : vector<8x128xf32>
    %330 = math.exp %329 : vector<8x128xf32>
    %cst_97 = arith.constant 1.000000e+00 : f32
    %331 = vector.broadcast %cst_97 : f32 to vector<8x128xf32>
    %332 = arith.addf %331, %330 : vector<8x128xf32>
    %333 = arith.divf %331, %332 : vector<8x128xf32>
    %334 = vector.extract_strided_slice %321 {offsets = [0, 256], sizes = [8, 128], strides = [1, 1]} : vector<8x512xf32> to vector<8x128xf32>
    %335 = vector.extract_strided_slice %321 {offsets = [0, 384], sizes = [8, 128], strides = [1, 1]} : vector<8x512xf32> to vector<8x128xf32>
    %336 = arith.mulf %327, %335 : vector<8x128xf32>
    %337 = arith.addf %334, %336 : vector<8x128xf32>
    %338 = math.tanh %337 : vector<8x128xf32>
    %cst_98 = arith.constant 1.000000e+00 : f32
    %339 = vector.broadcast %cst_98 : f32 to vector<8x128xf32>
    %340 = arith.subf %339, %333 : vector<8x128xf32>
    %341 = arith.mulf %340, %338 : vector<8x128xf32>
    %342 = arith.mulf %333, %301 : vector<8x128xf32>
    %343 = arith.addf %341, %342 : vector<8x128xf32>
    %344 = arith.truncf %343 : vector<8x128xf32> to vector<8x128xbf16>
    %cst_99 = arith.constant dense<0.000000e+00> : vector<8x128xf32>
    %345 = tpu.matmul %344, %5, %cst_99 {dimension_numbers = #tpu.dot_dimension_numbers<[1], [0], [0], [1], [0, 0, 1, 1], [], []>} : vector<8x128xbf16>, vector<128x128xbf16>, vector<8x128xf32> -> vector<8x128xf32>
    %346 = arith.addf %345, %14 : vector<8x128xf32>
    %347 = arith.truncf %346 : vector<8x128xf32> to vector<8x128xbf16>
    %348 = arith.index_cast %c7_i32 : i32 to index
    %c0_100 = arith.constant 0 : index
    %c0_101 = arith.constant 0 : index
    %349 = vector.load %arg10[%348, %c0_100, %c0_101] : memref<8x8x128xbf16, #tpu.memory_space<vmem>>, vector<1x8x128xbf16>
    %350 = vector.shape_cast %349 : vector<1x8x128xbf16> to vector<8x128xbf16>
    %351 = vector.shape_cast %347 : vector<8x128xbf16> to vector<1x8x128xbf16>
    tpu.vector_store %arg10[%348, %c0_100, %c0_101], %351 {strides = array<i32>} : memref<8x8x128xbf16, #tpu.memory_space<vmem>>, vector<1x8x128xbf16>,
    %c8_i32 = arith.constant 8 : i32
    %c0_102 = arith.constant 0 : index
    %c0_103 = arith.constant 0 : index
    %352 = vector.load %arg12[%c0_102, %c0_103] : memref<8x128xf32, #tpu.memory_space<vmem>>, vector<8x128xf32>
    tpu.vector_store %arg12[%c0_102, %c0_103], %343 {strides = array<i32>} : memref<8x128xf32, #tpu.memory_space<vmem>>, vector<8x128xf32>,
    %c0_i32_104 = arith.constant 0 : i32
    %353 = arith.cmpi eq, %arg1, %c0_i32_104 : i32
    %354 = arith.extui %353 : i1 to i32
    %c0_i32_105 = arith.constant 0 : i32
    %355 = arith.cmpi ne, %354, %c0_i32_105 : i32
    scf.if %355 {
      %c0_106 = arith.constant 0 : index
      %c0_107 = arith.constant 0 : index
      %356 = vector.load %arg11[%c0_106, %c0_107] : memref<8x128xf32, #tpu.memory_space<vmem>>, vector<8x128xf32>
      tpu.vector_store %arg11[%c0_106, %c0_107], %343 {strides = array<i32>} : memref<8x128xf32, #tpu.memory_space<vmem>>, vector<8x128xf32>,
    } else {
    }
    return
  }
  func.func @transform_0(%arg0: i32, %arg1: i32) -> (i32, i32, i32) {
    %c0_i32 = arith.constant 0 : i32
    %c0_i32_0 = arith.constant 0 : i32
    return %arg1, %arg0, %c0_i32 : i32, i32, i32
  }
  func.func @transform_1(%arg0: i32, %arg1: i32) -> (i32, i32) {
    %c0_i32 = arith.constant 0 : i32
    %c0_i32_0 = arith.constant 0 : i32
    return %arg0, %c0_i32 : i32, i32
  }
  func.func @transform_2(%arg0: i32, %arg1: i32) -> (i32, i32) {
    %c0_i32 = arith.constant 0 : i32
    %c0_i32_0 = arith.constant 0 : i32
    %c0_i32_1 = arith.constant 0 : i32
    return %c0_i32, %c0_i32_0 : i32, i32
  }
  func.func @transform_3(%arg0: i32, %arg1: i32) -> (i32, i32) {
    %c0_i32 = arith.constant 0 : i32
    %c0_i32_0 = arith.constant 0 : i32
    %c0_i32_1 = arith.constant 0 : i32
    return %c0_i32, %c0_i32_0 : i32, i32
  }
  func.func @transform_4(%arg0: i32, %arg1: i32) -> (i32, i32) {
    %c0_i32 = arith.constant 0 : i32
    %c0_i32_0 = arith.constant 0 : i32
    %c0_i32_1 = arith.constant 0 : i32
    return %c0_i32, %c0_i32_0 : i32, i32
  }
  func.func @transform_5(%arg0: i32, %arg1: i32) -> (i32, i32) {
    %c0_i32 = arith.constant 0 : i32
    %c0_i32_0 = arith.constant 0 : i32
    %c0_i32_1 = arith.constant 0 : i32
    return %c0_i32, %c0_i32_0 : i32, i32
  }
  func.func @transform_6(%arg0: i32, %arg1: i32) -> (i32, i32) {
    %c0_i32 = arith.constant 0 : i32
    %c0_i32_0 = arith.constant 0 : i32
    %c0_i32_1 = arith.constant 0 : i32
    return %c0_i32, %c0_i32_0 : i32, i32
  }
  func.func @transform_7(%arg0: i32, %arg1: i32) -> (i32, i32) {
    %c0_i32 = arith.constant 0 : i32
    %c0_i32_0 = arith.constant 0 : i32
    %c0_i32_1 = arith.constant 0 : i32
    return %c0_i32, %c0_i32_0 : i32, i32
  }
  func.func @transform_8(%arg0: i32, %arg1: i32) -> (i32, i32, i32) {
    %c0_i32 = arith.constant 0 : i32
    %c0_i32_0 = arith.constant 0 : i32
    return %arg1, %arg0, %c0_i32 : i32, i32, i32
  }
  func.func @transform_9(%arg0: i32, %arg1: i32) -> (i32, i32) {
    %c0_i32 = arith.constant 0 : i32
    %c0_i32_0 = arith.constant 0 : i32
    return %arg0, %c0_i32 : i32, i32
  }
}

</mosaic_0001>

<llo_original>
// kernel: rnn_agent_forward_seq.1
$region0: #{rnn_agent_forward_seq.1}
  #allocation0 [shape = 'u32[]', space=smem, size = 0x4, offset = 0x4, fixed_abs, tag = 'smem constant byte address 0x4 - core index']
  #allocation1 [shape = 'u32[144,128]{1,0:T(1,128)}', space=vmem, size = 0x12000, scoped, tag = 'internal scratch']
  #allocation2 [shape = 'f32[8,128]{1,0:T(8,128)}', space=vmem, size = 0x1000, scoped, tag = 'scratch operand']
  %s0 = inlined_call_operand.vmem [shape: bf16[8,8,16], index: 0, kind: input, shape index: {}]
  %s1 = inlined_call_operand.vmem [shape: f32[8,128], index: 1, kind: input, shape index: {}]
  %s2 = inlined_call_operand.vmem [shape: bf16[16,128], index: 2, kind: input, shape index: {}]
  %s3 = inlined_call_operand.vmem [shape: f32[1,128], index: 3, kind: input, shape index: {}]
  %s4 = inlined_call_operand.hbm [shape: bf16[256,512], index: 4, kind: input, shape index: {}]
  %s5 = inlined_call_operand.vmem [shape: f32[1,512], index: 5, kind: input, shape index: {}]
  %s6 = inlined_call_operand.vmem [shape: bf16[128,128], index: 6, kind: input, shape index: {}]
  %s7 = inlined_call_operand.vmem [shape: f32[1,128], index: 7, kind: input, shape index: {}]
  %s8 = inlined_call_operand.vmem [shape: bf16[8,8,128], index: 8, kind: output, shape index: {0}]
  %s9 = inlined_call_operand.hbm [shape: f32[8,128], index: 9, kind: output, shape index: {1}]
  %10 = xla_tuple %s8, %s9
  %s11 = sld [smem:[#allocation0]]
  $region62: #{rnn_agent_forward_seq.1} parent=0
    _
  %s13 = ssub.s32 1, %s11
  %s14 = scalar_select 0, %s13, %s11
  $region1: #{rnn_agent_forward_seq.1} parent=0
    #allocation3 [shape = 'u8[262144]{0}', space=vmem, size = 0x40000, scoped, tag = 'input window, operand 4, single buffered']
    #allocation4 [shape = 's32[1]{0}', space=sflag, size = 0x4, scoped, tag = 'scoped memory for rnn_agent_forward_seq.1']
    #allocation5 [shape = 's32[1]{0}', space=sflag, size = 0x4, scoped, tag = 'scoped memory for rnn_agent_forward_seq.1']
    #allocation6 [shape = 'u8[4096]{0}', space=vmem, size = 0x1000, scoped, tag = 'output window, operand 1, single buffered']
    %15 = vsyncpa [#allocation4], 0
    %16 = vsyncpa [#allocation5], 0
    // Predicated region
    $region2: #{rnn_agent_forward_seq.1} parent=1 // pred_check
      _
    $region3: #{rnn_agent_forward_seq.1} parent=1 // pred_check_branch
      %18 = sbr.rel (0) target = $region5
    $region4: #{rnn_agent_forward_seq.1} parent=1 // pred_region
      _
    $region5: #{rnn_agent_forward_seq.1} parent=1 // pred_fallthru
      _
    // Predicated region
    $region6: #{rnn_agent_forward_seq.1} parent=1 // pred_check
      _
    $region7: #{rnn_agent_forward_seq.1} parent=1 // pred_check_branch
      %20 = sbr.rel (0) target = $region9
    $region8: #{rnn_agent_forward_seq.1} parent=1 // pred_region
      _
    $region9: #{rnn_agent_forward_seq.1} parent=1 // pred_fallthru
      _
    // Predicated region
    $region10: #{rnn_agent_forward_seq.1} parent=1 // pred_check
      _
    $region11: #{rnn_agent_forward_seq.1} parent=1 // pred_check_branch
      %22 = sbr.rel (0) target = $region13
    $region12: #{rnn_agent_forward_seq.1} parent=1 // pred_region
      _
    $region13: #{rnn_agent_forward_seq.1} parent=1 // pred_fallthru
      _
    // Predicated region
    $region14: #{rnn_agent_forward_seq.1} parent=1 // pred_check
      _
    $region15: #{rnn_agent_forward_seq.1} parent=1 // pred_check_branch
      %24 = sbr.rel (0) target = $region17
    $region16: #{rnn_agent_forward_seq.1} parent=1 // pred_region
      _
    $region17: #{rnn_agent_forward_seq.1} parent=1 // pred_fallthru
      _
    // Predicated region
    $region18: #{rnn_agent_forward_seq.1} parent=1 // pred_check
      _
    $region19: #{rnn_agent_forward_seq.1} parent=1 // pred_check_branch
      %26 = sbr.rel (0) target = $region21
    $region20: #{rnn_agent_forward_seq.1} parent=1 // pred_region
      %s28 = ssub.s32 8192, 8192
      %29 = vsyncadd [#allocation4], %s28
      %s30 = sshll.u32 [#allocation3], 4
      %s31 = int_to_ptr.vmem [resolvable:$true] %s30
      %36 = dma.hbm_to_vmem [thread:$0]  %s4, 8192, %s31, [#allocation4], 256, 256, 16
    $region21: #{rnn_agent_forward_seq.1} parent=1 // pred_fallthru
      _
    // Predicated region
    $region22: #{rnn_agent_forward_seq.1} parent=1 // pred_check
      _
    $region23: #{rnn_agent_forward_seq.1} parent=1 // pred_check_branch
      %38 = sbr.rel (0) target = $region25
    $region24: #{rnn_agent_forward_seq.1} parent=1 // pred_region
      _
    $region25: #{rnn_agent_forward_seq.1} parent=1 // pred_fallthru
      _
    // Predicated region
    $region26: #{rnn_agent_forward_seq.1} parent=1 // pred_check
      _
    $region27: #{rnn_agent_forward_seq.1} parent=1 // pred_check_branch
      %40 = sbr.rel (0) target = $region29
    $region28: #{rnn_agent_forward_seq.1} parent=1 // pred_region
      _
    $region29: #{rnn_agent_forward_seq.1} parent=1 // pred_fallthru
      _
    // Predicated region
    $region30: #{rnn_agent_forward_seq.1} parent=1 // pred_check
      _
    $region31: #{rnn_agent_forward_seq.1} parent=1 // pred_check_branch
      %42 = sbr.rel (0) target = $region33
    $region32: #{rnn_agent_forward_seq.1} parent=1 // pred_region
      _
    $region33: #{rnn_agent_forward_seq.1} parent=1 // pred_fallthru
      _
    // Predicated region
    $region34: #{rnn_agent_forward_seq.1} parent=1 // pred_check
      _
    $region35: #{rnn_agent_forward_seq.1} parent=1 // pred_check_branch
      %44 = sbr.rel (0) target = $region37
    $region36: #{rnn_agent_forward_seq.1} parent=1 // pred_region
      %45 = dma.done [#allocation4], 8192
    $region37: #{rnn_agent_forward_seq.1} parent=1 // pred_fallthru
      _
    %p47 = scmp.eq.s32.totalorder 0, 0
    // Predicated region
    $region38: #{rnn_agent_forward_seq.1} parent=1 // pred_check
      %p48 = pneg %p47
    $region39: #{rnn_agent_forward_seq.1} parent=1 // pred_check_branch
      %50 = sbr.rel (%p48) target = $region41
    $region40: #{rnn_agent_forward_seq.1} parent=1 // pred_region
      %v51 = vld [vmem:[%s1] sm:$0xff]
      %52 = vst [vmem:[#allocation2] sm:$0xff] %v51
    $region41: #{rnn_agent_forward_seq.1} parent=1 // pred_fallthru
      _
    %v53 = vld [vmem:[%s2] sm:$0xf]
    %v54 = vld [vmem:[%s2 + $0x4] sm:$0xf]
    %v55 = vld [vmem:[#allocation3] sm:$0xff]
    %v56 = vld [vmem:[#allocation3 + $0x8] sm:$0xff]
    %v57 = vld [vmem:[#allocation3 + $0x10] sm:$0xff]
    %v58 = vld [vmem:[#allocation3 + $0x18] sm:$0xff]
    %v59 = vld [vmem:[#allocation3 + $0x20] sm:$0xff]
    %v60 = vld [vmem:[#allocation3 + $0x28] sm:$0xff]
    %v61 = vld [vmem:[#allocation3 + $0x30] sm:$0xff]
    %v62 = vld [vmem:[#allocation3 + $0x38] sm:$0xff]
    %v63 = vld [vmem:[#allocation3 + $0x40] sm:$0xff]
    %v64 = vld [vmem:[#allocation3 + $0x48] sm:$0xff]
    %v65 = vld [vmem:[#allocation3 + $0x50] sm:$0xff]
    %v66 = vld [vmem:[#allocation3 + $0x58] sm:$0xff]
    %v67 = vld [vmem:[#allocation3 + $0x60] sm:$0xff]
    %v68 = vld [vmem:[#allocation3 + $0x68] sm:$0xff]
    %v69 = vld [vmem:[#allocation3 + $0x70] sm:$0xff]
    %v70 = vld [vmem:[#allocation3 + $0x78] sm:$0xff]
    %v71 = vld [vmem:[#allocation3 + $0x80] sm:$0xff]
    %v72 = vld [vmem:[#allocation3 + $0x88] sm:$0xff]
    %v73 = vld [vmem:[#allocation3 + $0x90] sm:$0xff]
    %v74 = vld [vmem:[#allocation3 + $0x98] sm:$0xff]
    %v75 = vld [vmem:[#allocation3 + $0xa0] sm:$0xff]
    %v76 = vld [vmem:[#allocation3 + $0xa8] sm:$0xff]
    %v77 = vld [vmem:[#allocation3 + $0xb0] sm:$0xff]
    %v78 = vld [vmem:[#allocation3 + $0xb8] sm:$0xff]
    %v79 = vld [vmem:[#allocation3 + $0xc0] sm:$0xff]
    %v80 = vld [vmem:[#allocation3 + $0xc8] sm:$0xff]
    %v81 = vld [vmem:[#allocation3 + $0xd0] sm:$0xff]
    %v82 = vld [vmem:[#allocation3 + $0xd8] sm:$0xff]
    %v83 = vld [vmem:[#allocation3 + $0xe0] sm:$0xff]
    %v84 = vld [vmem:[#allocation3 + $0xe8] sm:$0xff]
    %v85 = vld [vmem:[#allocation3 + $0xf0] sm:$0xff]
    %v86 = vld [vmem:[#allocation3 + $0xf8] sm:$0xff]
    %v87 = vld [vmem:[#allocation3 + $0x100] sm:$0xff]
    %v88 = vld [vmem:[#allocation3 + $0x108] sm:$0xff]
    %v89 = vld [vmem:[#allocation3 + $0x110] sm:$0xff]
    %v90 = vld [vmem:[#allocation3 + $0x118] sm:$0xff]
    %v91 = vld [vmem:[#allocation3 + $0x120] sm:$0xff]
    %v92 = vld [vmem:[#allocation3 + $0x128] sm:$0xff]
    %v93 = vld [vmem:[#allocation3 + $0x130] sm:$0xff]
    %v94 = vld [vmem:[#allocation3 + $0x138] sm:$0xff]
    %v95 = vld [vmem:[#allocation3 + $0x140] sm:$0xff]
    %v96 = vld [vmem:[#allocation3 + $0x148] sm:$0xff]
    %v97 = vld [vmem:[#allocation3 + $0x150] sm:$0xff]
    %v98 = vld [vmem:[#allocation3 + $0x158] sm:$0xff]
    %v99 = vld [vmem:[#allocation3 + $0x160] sm:$0xff]
    %v100 = vld [vmem:[#allocation3 + $0x168] sm:$0xff]
    %v101 = vld [vmem:[#allocation3 + $0x170] sm:$0xff]
    %v102 = vld [vmem:[#allocation3 + $0x178] sm:$0xff]
    %v103 = vld [vmem:[#allocation3 + $0x180] sm:$0xff]
    %v104 = vld [vmem:[#allocation3 + $0x188] sm:$0xff]
    %v105 = vld [vmem:[#allocation3 + $0x190] sm:$0xff]
    %v106 = vld [vmem:[#allocation3 + $0x198] sm:$0xff]
    %v107 = vld [vmem:[#allocation3 + $0x1a0] sm:$0xff]
    %v108 = vld [vmem:[#allocation3 + $0x1a8] sm:$0xff]
    %v109 = vld [vmem:[#allocation3 + $0x1b0] sm:$0xff]
    %v110 = vld [vmem:[#allocation3 + $0x1b8] sm:$0xff]
    %v111 = vld [vmem:[#allocation3 + $0x1c0] sm:$0xff]
    %v112 = vld [vmem:[#allocation3 + $0x1c8] sm:$0xff]
    %v113 = vld [vmem:[#allocation3 + $0x1d0] sm:$0xff]
    %v114 = vld [vmem:[#allocation3 + $0x1d8] sm:$0xff]
    %v115 = vld [vmem:[#allocation3 + $0x1e0] sm:$0xff]
    %v116 = vld [vmem:[#allocation3 + $0x1e8] sm:$0xff]
    %v117 = vld [vmem:[#allocation3 + $0x1f0] sm:$0xff]
    %v118 = vld [vmem:[#allocation3 + $0x1f8] sm:$0xff]
    %v119 = vld [vmem:[%s6] sm:$0xf]
    %v120 = vld [vmem:[%s6 + $0x4] sm:$0xf]
    %v121 = vld [vmem:[%s6 + $0x8] sm:$0xf]
    %v122 = vld [vmem:[%s6 + $0xc] sm:$0xf]
    %v123 = vld [vmem:[%s6 + $0x10] sm:$0xf]
    %v124 = vld [vmem:[%s6 + $0x14] sm:$0xf]
    %v125 = vld [vmem:[%s6 + $0x18] sm:$0xf]
    %v126 = vld [vmem:[%s6 + $0x1c] sm:$0xf]
    %v127 = vld [vmem:[%s6 + $0x20] sm:$0xf]
    %v128 = vld [vmem:[%s6 + $0x24] sm:$0xf]
    %v129 = vld [vmem:[%s6 + $0x28] sm:$0xf]
    %v130 = vld [vmem:[%s6 + $0x2c] sm:$0xf]
    %v131 = vld [vmem:[%s6 + $0x30] sm:$0xf]
    %v132 = vld [vmem:[%s6 + $0x34] sm:$0xf]
    %v133 = vld [vmem:[%s6 + $0x38] sm:$0xf]
    %v134 = vld [vmem:[%s6 + $0x3c] sm:$0xf]
    %v135 = vld [vmem:[%s3] sm:$0x1]
    %v137 = vlaneseq
    %v138 = vshrl.u32 %v137, 7
    %v139 = vsub.s32 0, %v138
    %v140 = vrot.slane %v135, %v139
    %v142 = vld [vmem:[%s5] sm:$0xf]
    %v144 = vlaneseq
    %v145 = vshrl.u32 %v144, 7
    %v146 = vsub.s32 0, %v145
    %v147 = vrot.slane %v142, %v146
    %v148 = vlaneseq
    %v149 = vshrl.u32 %v148, 7
    %v150 = vsub.s32 1, %v149
    %v151 = vrot.slane %v142, %v150
    %v152 = vlaneseq
    %v153 = vshrl.u32 %v152, 7
    %v154 = vsub.s32 2, %v153
    %v155 = vrot.slane %v142, %v154
    %v156 = vlaneseq
    %v157 = vshrl.u32 %v156, 7
    %v158 = vsub.s32 3, %v157
    %v159 = vrot.slane %v142, %v158
    %v164 = vld [vmem:[%s7] sm:$0x1]
    %v166 = vlaneseq
    %v167 = vshrl.u32 %v166, 7
    %v168 = vsub.s32 0, %v167
    %v169 = vrot.slane %v164, %v168
    %v171 = vld [vmem:[#allocation2] sm:$0xff]
    %v172 = vld [vmem:[%s0] sm:$0xf]
    %v175 = vunpack.c.l.b16 %v53
    %v176 = vunpack.c.l.b16 %v54
    %v177 = vpack.c.b16 %v176, %v175
    %vm179 = vcmask 130048
    %v181 = vsel %vm179, %v172, 0
    %183 = vmatprep.subr.bf16.mxu0 0
    %184 = vmatpush1.bf16.msra.mxu0 %v177
    %185 = vmatprep.subr.bf16.mxu0 0
    %186 = vmatpush1.bf16.msra.mxu0 0
    %187 = vmatprep.subr.bf16.mxu0 0
    %188 = vmatpush1.bf16.msra.mxu0 0
    %189 = vmatprep.subr.bf16.mxu0 0
    %190 = vmatpush1.bf16.msra.mxu0 0
    %191 = vmatprep.subr.bf16.mxu0 0
    %192 = vmatpush1.bf16.msra.mxu0 0
    %193 = vmatprep.subr.bf16.mxu0 0
    %194 = vmatpush1.bf16.msra.mxu0 0
    %195 = vmatprep.subr.bf16.mxu0 0
    %196 = vmatpush1.bf16.msra.mxu0 0
    %197 = vmatprep.subr.bf16.mxu0 0
    %198 = vmatpush1.bf16.msra.mxu0 0
    %199 = vmatprep.subr.bf16.mxu0 0
    %200 = vmatpush1.bf16.msra.mxu0 0
    %201 = vmatprep.subr.bf16.mxu0 0
    %202 = vmatpush1.bf16.msra.mxu0 0
    %203 = vmatprep.subr.bf16.mxu0 0
    %204 = vmatpush1.bf16.msra.mxu0 0
    %205 = vmatprep.subr.bf16.mxu0 0
    %206 = vmatpush1.bf16.msra.mxu0 0
    %207 = vmatprep.subr.bf16.mxu0 0
    %208 = vmatpush1.bf16.msra.mxu0 0
    %209 = vmatprep.subr.bf16.mxu0 0
    %210 = vmatpush1.bf16.msra.mxu0 0
    %211 = vmatprep.subr.bf16.mxu0 0
    %212 = vmatpush1.bf16.msra.mxu0 0
    %213 = vmatprep.subr.bf16.mxu0 0
    %214 = vmatpush1.bf16.msra.mxu0 0
    %215 = vmatprep.mubr.bf16.mxu0 0
    %216 = vmatmul.mubr.bf16.gmra.mrb[0].mxu0 %v181
    %v217 = vpop.f32.mrb[0].mxu0
    %v218 = vadd.f32 %v140, %v217
    %v219 = vpop.f32.mrb[0].mxu0
    %v220 = vpop.f32.mrb[0].mxu0
    %v221 = vpop.f32.mrb[0].mxu0
    %222 = vdwg.mxu0
    %v223 = vmax.f32 %v218, 0.0
    %v224 = vpack.c.bf16 %v223, %v223
    %v225 = vpack.c.bf16 %v171, %v171
    %v290 = vunpack.c.l.b16 %v55
    %v291 = vunpack.c.h.b16 %v55
    %v292 = vunpack.c.l.b16 %v56
    %v293 = vunpack.c.h.b16 %v56
    %v294 = vunpack.c.l.b16 %v57
    %v295 = vunpack.c.h.b16 %v57
    %v296 = vunpack.c.l.b16 %v58
    %v297 = vunpack.c.h.b16 %v58
    %v298 = vunpack.c.l.b16 %v59
    %v299 = vunpack.c.h.b16 %v59
    %v300 = vunpack.c.l.b16 %v60
    %v301 = vunpack.c.h.b16 %v60
    %v302 = vunpack.c.l.b16 %v61
    %v303 = vunpack.c.h.b16 %v61
    %v304 = vunpack.c.l.b16 %v62
    %v305 = vunpack.c.h.b16 %v62
    %v306 = vunpack.c.l.b16 %v63
    %v307 = vunpack.c.h.b16 %v63
    %v308 = vunpack.c.l.b16 %v64
    %v309 = vunpack.c.h.b16 %v64
    %v310 = vunpack.c.l.b16 %v65
    %v311 = vunpack.c.h.b16 %v65
    %v312 = vunpack.c.l.b16 %v66
    %v313 = vunpack.c.h.b16 %v66
    %v314 = vunpack.c.l.b16 %v67
    %v315 = vunpack.c.h.b16 %v67
    %v316 = vunpack.c.l.b16 %v68
    %v317 = vunpack.c.h.b16 %v68
    %v318 = vunpack.c.l.b16 %v69
    %v319 = vunpack.c.h.b16 %v69
    %v320 = vunpack.c.l.b16 %v70
    %v321 = vunpack.c.h.b16 %v70
    %v322 = vunpack.c.l.b16 %v71
    %v323 = vunpack.c.h.b16 %v71
    %v324 = vunpack.c.l.b16 %v72
    %v325 = vunpack.c.h.b16 %v72
    %v326 = vunpack.c.l.b16 %v73
    %v327 = vunpack.c.h.b16 %v73
    %v328 = vunpack.c.l.b16 %v74
    %v329 = vunpack.c.h.b16 %v74
    %v330 = vunpack.c.l.b16 %v75
    %v331 = vunpack.c.h.b16 %v75
    %v332 = vunpack.c.l.b16 %v76
    %v333 = vunpack.c.h.b16 %v76
    %v334 = vunpack.c.l.b16 %v77
    %v335 = vunpack.c.h.b16 %v77
    %v336 = vunpack.c.l.b16 %v78
    %v337 = vunpack.c.h.b16 %v78
    %v338 = vunpack.c.l.b16 %v79
    %v339 = vunpack.c.h.b16 %v79
    %v340 = vunpack.c.l.b16 %v80
    %v341 = vunpack.c.h.b16 %v80
    %v342 = vunpack.c.l.b16 %v81
    %v343 = vunpack.c.h.b16 %v81
    %v344 = vunpack.c.l.b16 %v82
    %v345 = vunpack.c.h.b16 %v82
    %v346 = vunpack.c.l.b16 %v83
    %v347 = vunpack.c.h.b16 %v83
    %v348 = vunpack.c.l.b16 %v84
    %v349 = vunpack.c.h.b16 %v84
    %v350 = vunpack.c.l.b16 %v85
    %v351 = vunpack.c.h.b16 %v85
    %v352 = vunpack.c.l.b16 %v86
    %v353 = vunpack.c.h.b16 %v86
    %v354 = vunpack.c.l.b16 %v87
    %v355 = vunpack.c.h.b16 %v87
    %v356 = vunpack.c.l.b16 %v88
    %v357 = vunpack.c.h.b16 %v88
    %v358 = vunpack.c.l.b16 %v89
    %v359 = vunpack.c.h.b16 %v89
    %v360 = vunpack.c.l.b16 %v90
    %v361 = vunpack.c.h.b16 %v90
    %v362 = vunpack.c.l.b16 %v91
    %v363 = vunpack.c.h.b16 %v91
    %v364 = vunpack.c.l.b16 %v92
    %v365 = vunpack.c.h.b16 %v92
    %v366 = vunpack.c.l.b16 %v93
    %v367 = vunpack.c.h.b16 %v93
    %v368 = vunpack.c.l.b16 %v94
    %v369 = vunpack.c.h.b16 %v94
    %v370 = vunpack.c.l.b16 %v95
    %v371 = vunpack.c.h.b16 %v95
    %v372 = vunpack.c.l.b16 %v96
    %v373 = vunpack.c.h.b16 %v96
    %v374 = vunpack.c.l.b16 %v97
    %v375 = vunpack.c.h.b16 %v97
    %v376 = vunpack.c.l.b16 %v98
    %v377 = vunpack.c.h.b16 %v98
    %v378 = vunpack.c.l.b16 %v99
    %v379 = vunpack.c.h.b16 %v99
    %v380 = vunpack.c.l.b16 %v100
    %v381 = vunpack.c.h.b16 %v100
    %v382 = vunpack.c.l.b16 %v101
    %v383 = vunpack.c.h.b16 %v101
    %v384 = vunpack.c.l.b16 %v102
    %v385 = vunpack.c.h.b16 %v102
    %v386 = vunpack.c.l.b16 %v103
    %v387 = vunpack.c.h.b16 %v103
    %v388 = vunpack.c.l.b16 %v104
    %v389 = vunpack.c.h.b16 %v104
    %v390 = vunpack.c.l.b16 %v105
    %v391 = vunpack.c.h.b16 %v105
    %v392 = vunpack.c.l.b16 %v106
    %v393 = vunpack.c.h.b16 %v106
    %v394 = vunpack.c.l.b16 %v107
    %v395 = vunpack.c.h.b16 %v107
    %v396 = vunpack.c.l.b16 %v108
    %v397 = vunpack.c.h.b16 %v108
    %v398 = vunpack.c.l.b16 %v109
    %v399 = vunpack.c.h.b16 %v109
    %v400 = vunpack.c.l.b16 %v110
    %v401 = vunpack.c.h.b16 %v110
    %v402 = vunpack.c.l.b16 %v111
    %v403 = vunpack.c.h.b16 %v111
    %v404 = vunpack.c.l.b16 %v112
    %v405 = vunpack.c.h.b16 %v112
    %v406 = vunpack.c.l.b16 %v113
    %v407 = vunpack.c.h.b16 %v113
    %v408 = vunpack.c.l.b16 %v114
    %v409 = vunpack.c.h.b16 %v114
    %v410 = vunpack.c.l.b16 %v115
    %v411 = vunpack.c.h.b16 %v115
    %v412 = vunpack.c.l.b16 %v116
    %v413 = vunpack.c.h.b16 %v116
    %v414 = vunpack.c.l.b16 %v117
    %v415 = vunpack.c.h.b16 %v117
    %v416 = vunpack.c.l.b16 %v118
    %v417 = vunpack.c.h.b16 %v118
    %v418 = vpack.c.b16 %v294, %v290
    %v419 = vpack.c.b16 %v295, %v291
    %v420 = vpack.c.b16 %v296, %v292
    %v421 = vpack.c.b16 %v297, %v293
    %v422 = vpack.c.b16 %v302, %v298
    %v423 = vpack.c.b16 %v303, %v299
    %v424 = vpack.c.b16 %v304, %v300
    %v425 = vpack.c.b16 %v305, %v301
    %v426 = vpack.c.b16 %v310, %v306
    %v427 = vpack.c.b16 %v311, %v307
    %v428 = vpack.c.b16 %v312, %v308
    %v429 = vpack.c.b16 %v313, %v309
    %v430 = vpack.c.b16 %v318, %v314
    %v431 = vpack.c.b16 %v319, %v315
    %v432 = vpack.c.b16 %v320, %v316
    %v433 = vpack.c.b16 %v321, %v317
    %v434 = vpack.c.b16 %v326, %v322
    %v435 = vpack.c.b16 %v327, %v323
    %v436 = vpack.c.b16 %v328, %v324
    %v437 = vpack.c.b16 %v329, %v325
    %v438 = vpack.c.b16 %v334, %v330
    %v439 = vpack.c.b16 %v335, %v331
    %v440 = vpack.c.b16 %v336, %v332
    %v441 = vpack.c.b16 %v337, %v333
    %v442 = vpack.c.b16 %v342, %v338
    %v443 = vpack.c.b16 %v343, %v339
    %v444 = vpack.c.b16 %v344, %v340
    %v445 = vpack.c.b16 %v345, %v341
    %v446 = vpack.c.b16 %v350, %v346
    %v447 = vpack.c.b16 %v351, %v347
    %v448 = vpack.c.b16 %v352, %v348
    %v449 = vpack.c.b16 %v353, %v349
    %v450 = vpack.c.b16 %v358, %v354
    %v451 = vpack.c.b16 %v359, %v355
    %v452 = vpack.c.b16 %v360, %v356
    %v453 = vpack.c.b16 %v361, %v357
    %v454 = vpack.c.b16 %v366, %v362
    %v455 = vpack.c.b16 %v367, %v363
    %v456 = vpack.c.b16 %v368, %v364
    %v457 = vpack.c.b16 %v369, %v365
    %v458 = vpack.c.b16 %v374, %v370
    %v459 = vpack.c.b16 %v375, %v371
    %v460 = vpack.c.b16 %v376, %v372
    %v461 = vpack.c.b16 %v377, %v373
    %v462 = vpack.c.b16 %v382, %v378
    %v463 = vpack.c.b16 %v383, %v379
    %v464 = vpack.c.b16 %v384, %v380
    %v465 = vpack.c.b16 %v385, %v381
    %v466 = vpack.c.b16 %v390, %v386
    %v467 = vpack.c.b16 %v391, %v387
    %v468 = vpack.c.b16 %v392, %v388
    %v469 = vpack.c.b16 %v393, %v389
    %v470 = vpack.c.b16 %v398, %v394
    %v471 = vpack.c.b16 %v399, %v395
    %v472 = vpack.c.b16 %v400, %v396
    %v473 = vpack.c.b16 %v401, %v397
    %v474 = vpack.c.b16 %v406, %v402
    %v475 = vpack.c.b16 %v407, %v403
    %v476 = vpack.c.b16 %v408, %v404
    %v477 = vpack.c.b16 %v409, %v405
    %v478 = vpack.c.b16 %v414, %v410
    %v479 = vpack.c.b16 %v415, %v411
    %v480 = vpack.c.b16 %v416, %v412
    %v481 = vpack.c.b16 %v417, %v413
    %546 = vmatprep.subr.bf16.mxu0 %v419
    %547 = vmatpush1.bf16.msra.mxu0 %v418
    %548 = vmatprep.subr.bf16.mxu0 %v423
    %549 = vmatpush1.bf16.msra.mxu0 %v422
    %550 = vmatprep.subr.bf16.mxu0 %v427
    %551 = vmatpush1.bf16.msra.mxu0 %v426
    %552 = vmatprep.subr.bf16.mxu0 %v431
    %553 = vmatpush1.bf16.msra.mxu0 %v430
    %554 = vmatprep.subr.bf16.mxu0 %v435
    %555 = vmatpush1.bf16.msra.mxu0 %v434
    %556 = vmatprep.subr.bf16.mxu0 %v439
    %557 = vmatpush1.bf16.msra.mxu0 %v438
    %558 = vmatprep.subr.bf16.mxu0 %v443
    %559 = vmatpush1.bf16.msra.mxu0 %v442
    %560 = vmatprep.subr.bf16.mxu0 %v447
    %561 = vmatpush1.bf16.msra.mxu0 %v446
    %562 = vmatprep.subr.bf16.mxu0 %v451
    %563 = vmatpush1.bf16.msra.mxu0 %v450
    %564 = vmatprep.subr.bf16.mxu0 %v455
    %565 = vmatpush1.bf16.msra.mxu0 %v454
    %566 = vmatprep.subr.bf16.mxu0 %v459
    %567 = vmatpush1.bf16.msra.mxu0 %v458
    %568 = vmatprep.subr.bf16.mxu0 %v463
    %569 = vmatpush1.bf16.msra.mxu0 %v462
    %570 = vmatprep.subr.bf16.mxu0 %v467
    %571 = vmatpush1.bf16.msra.mxu0 %v466
    %572 = vmatprep.subr.bf16.mxu0 %v471
    %573 = vmatpush1.bf16.msra.mxu0 %v470
    %574 = vmatprep.subr.bf16.mxu0 %v475
    %575 = vmatpush1.bf16.msra.mxu0 %v474
    %576 = vmatprep.subr.bf16.mxu0 %v479
    %577 = vmatpush1.bf16.msra.mxu0 %v478
    %578 = vmatprep.mubr.bf16.mxu0 %v225
    %579 = vmatmul.mubr.bf16.gmra.mrb[0].mxu0 %v224
    %v580 = vpop.f32.mrb[0].mxu0
    %v581 = vadd.f32 %v147, %v580
    %v582 = vpop.f32.mrb[0].mxu0
    %v583 = vadd.f32 %v151, %v582
    %v584 = vpop.f32.mrb[0].mxu0
    %v585 = vpop.f32.mrb[0].mxu0
    %586 = vdwg.mxu0
    %587 = vmatprep.subr.bf16.mxu0 %v421
    %588 = vmatpush1.bf16.msra.mxu0 %v420
    %589 = vmatprep.subr.bf16.mxu0 %v425
    %590 = vmatpush1.bf16.msra.mxu0 %v424
    %591 = vmatprep.subr.bf16.mxu0 %v429
    %592 = vmatpush1.bf16.msra.mxu0 %v428
    %593 = vmatprep.subr.bf16.mxu0 %v433
    %594 = vmatpush1.bf16.msra.mxu0 %v432
    %595 = vmatprep.subr.bf16.mxu0 %v437
    %596 = vmatpush1.bf16.msra.mxu0 %v436
    %597 = vmatprep.subr.bf16.mxu0 %v441
    %598 = vmatpush1.bf16.msra.mxu0 %v440
    %599 = vmatprep.subr.bf16.mxu0 %v445
    %600 = vmatpush1.bf16.msra.mxu0 %v444
    %601 = vmatprep.subr.bf16.mxu0 %v449
    %602 = vmatpush1.bf16.msra.mxu0 %v448
    %603 = vmatprep.subr.bf16.mxu0 %v453
    %604 = vmatpush1.bf16.msra.mxu0 %v452
    %605 = vmatprep.subr.bf16.mxu0 %v457
    %606 = vmatpush1.bf16.msra.mxu0 %v456
    %607 = vmatprep.subr.bf16.mxu0 %v461
    %608 = vmatpush1.bf16.msra.mxu0 %v460
    %609 = vmatprep.subr.bf16.mxu0 %v465
    %610 = vmatpush1.bf16.msra.mxu0 %v464
    %611 = vmatprep.subr.bf16.mxu0 %v469
    %612 = vmatpush1.bf16.msra.mxu0 %v468
    %613 = vmatprep.subr.bf16.mxu0 %v473
    %614 = vmatpush1.bf16.msra.mxu0 %v472
    %615 = vmatprep.subr.bf16.mxu0 %v477
    %616 = vmatpush1.bf16.msra.mxu0 %v476
    %617 = vmatprep.subr.bf16.mxu0 %v481
    %618 = vmatpush1.bf16.msra.mxu0 %v480
    %619 = vmatprep.mubr.bf16.mxu0 %v225
    %620 = vmatmul.mubr.bf16.gmra.mrb[0].mxu0 %v224
    %v621 = vpop.f32.mrb[0].mxu0
    %v622 = vadd.f32 %v155, %v621
    %v623 = vpop.f32.mrb[0].mxu0
    %v624 = vadd.f32 %v159, %v623
    %v625 = vpop.f32.mrb[0].mxu0
    %v626 = vpop.f32.mrb[0].mxu0
    %627 = vdwg.mxu0
    %v628 = vxor.u32 %v581, 2147483648
    %v629 = vmul.f32 %v628, 1.442695
    %v630 = vpow.pop %v629
    %v631 = vadd.f32 %v630, 1.0
    %v632 = vrcp.pop %v631
    %v633 = vmul.f32 1.0, %v632
    %v634 = vxor.u32 %v583, 2147483648
    %v635 = vmul.f32 %v634, 1.442695
    %v636 = vpow.pop %v635
    %v637 = vadd.f32 %v636, 1.0
    %v638 = vrcp.pop %v637
    %v639 = vmul.f32 1.0, %v638
    %v640 = vmul.f32 %v633, %v624
    %v641 = vadd.f32 %v622, %v640
    %v642 = vtanh.pop %v641
    %v643 = vsub.f32 1.0, %v639
    %v644 = vmul.f32 %v643, %v642
    %v645 = vmul.f32 %v639, %v171
    %v646 = vadd.f32 %v644, %v645
    %v647 = vpack.c.bf16 %v646, %v646
    %v664 = vunpack.c.l.b16 %v119
    %v665 = vunpack.c.l.b16 %v120
    %v666 = vunpack.c.l.b16 %v121
    %v667 = vunpack.c.l.b16 %v122
    %v668 = vunpack.c.l.b16 %v123
    %v669 = vunpack.c.l.b16 %v124
    %v670 = vunpack.c.l.b16 %v125
    %v671 = vunpack.c.l.b16 %v126
    %v672 = vunpack.c.l.b16 %v127
    %v673 = vunpack.c.l.b16 %v128
    %v674 = vunpack.c.l.b16 %v129
    %v675 = vunpack.c.l.b16 %v130
    %v676 = vunpack.c.l.b16 %v131
    %v677 = vunpack.c.l.b16 %v132
    %v678 = vunpack.c.l.b16 %v133
    %v679 = vunpack.c.l.b16 %v134
    %v680 = vpack.c.b16 %v665, %v664
    %v681 = vpack.c.b16 %v667, %v666
    %v682 = vpack.c.b16 %v669, %v668
    %v683 = vpack.c.b16 %v671, %v670
    %v684 = vpack.c.b16 %v673, %v672
    %v685 = vpack.c.b16 %v675, %v674
    %v686 = vpack.c.b16 %v677, %v676
    %v687 = vpack.c.b16 %v679, %v678
    %696 = vmatprep.subr.bf16.mxu0 0
    %697 = vmatpush1.bf16.msra.mxu0 %v680
    %698 = vmatprep.subr.bf16.mxu0 0
    %699 = vmatpush1.bf16.msra.mxu0 %v681
    %700 = vmatprep.subr.bf16.mxu0 0
    %701 = vmatpush1.bf16.msra.mxu0 %v682
    %702 = vmatprep.subr.bf16.mxu0 0
    %703 = vmatpush1.bf16.msra.mxu0 %v683
    %704 = vmatprep.subr.bf16.mxu0 0
    %705 = vmatpush1.bf16.msra.mxu0 %v684
    %706 = vmatprep.subr.bf16.mxu0 0
    %707 = vmatpush1.bf16.msra.mxu0 %v685
    %708 = vmatprep.subr.bf16.mxu0 0
    %709 = vmatpush1.bf16.msra.mxu0 %v686
    %710 = vmatprep.subr.bf16.mxu0 0
    %711 = vmatpush1.bf16.msra.mxu0 %v687
    %712 = vmatprep.subr.bf16.mxu0 0
    %713 = vmatpush1.bf16.msra.mxu0 0
    %714 = vmatprep.subr.bf16.mxu0 0
    %715 = vmatpush1.bf16.msra.mxu0 0
    %716 = vmatprep.subr.bf16.mxu0 0
    %717 = vmatpush1.bf16.msra.mxu0 0
    %718 = vmatprep.subr.bf16.mxu0 0
    %719 = vmatpush1.bf16.msra.mxu0 0
    %720 = vmatprep.subr.bf16.mxu0 0
    %721 = vmatpush1.bf16.msra.mxu0 0
    %722 = vmatprep.subr.bf16.mxu0 0
    %723 = vmatpush1.bf16.msra.mxu0 0
    %724 = vmatprep.subr.bf16.mxu0 0
    %725 = vmatpush1.bf16.msra.mxu0 0
    %726 = vmatprep.subr.bf16.mxu0 0
    %727 = vmatpush1.bf16.msra.mxu0 0
    %728 = vmatprep.mubr.bf16.mxu0 0
    %729 = vmatmul.mubr.bf16.gmra.mrb[0].mxu0 %v647
    %v730 = vpop.f32.mrb[0].mxu0
    %v731 = vadd.f32 %v169, %v730
    %v732 = vpop.f32.mrb[0].mxu0
    %v733 = vpop.f32.mrb[0].mxu0
    %v734 = vpop.f32.mrb[0].mxu0
    %735 = vdwg.mxu0
    %v736 = vpack.c.bf16 %v731, %v731
    %737 = vst [vmem:[%s8] sm:$0xf] %v736
    %s738 = scalar_lea.vmem %s0, 4
    %v739 = vld [vmem:[%s738] sm:$0xf]
    %v741 = vsel %vm179, %v739, 0
    %743 = vmatprep.subr.bf16.mxu0 0
    %744 = vmatpush1.bf16.msra.mxu0 %v177
    %745 = vmatprep.subr.bf16.mxu0 0
    %746 = vmatpush1.bf16.msra.mxu0 0
    %747 = vmatprep.subr.bf16.mxu0 0
    %748 = vmatpush1.bf16.msra.mxu0 0
    %749 = vmatprep.subr.bf16.mxu0 0
    %750 = vmatpush1.bf16.msra.mxu0 0
    %751 = vmatprep.subr.bf16.mxu0 0
    %752 = vmatpush1.bf16.msra.mxu0 0
    %753 = vmatprep.subr.bf16.mxu0 0
    %754 = vmatpush1.bf16.msra.mxu0 0
    %755 = vmatprep.subr.bf16.mxu0 0
    %756 = vmatpush1.bf16.msra.mxu0 0
    %757 = vmatprep.subr.bf16.mxu0 0
    %758 = vmatpush1.bf16.msra.mxu0 0
    %759 = vmatprep.subr.bf16.mxu0 0
    %760 = vmatpush1.bf16.msra.mxu0 0
    %761 = vmatprep.subr.bf16.mxu0 0
    %762 = vmatpush1.bf16.msra.mxu0 0
    %763 = vmatprep.subr.bf16.mxu0 0
    %764 = vmatpush1.bf16.msra.mxu0 0
    %765 = vmatprep.subr.bf16.mxu0 0
    %766 = vmatpush1.bf16.msra.mxu0 0
    %767 = vmatprep.subr.bf16.mxu0 0
    %768 = vmatpush1.bf16.msra.mxu0 0
    %769 = vmatprep.subr.bf16.mxu0 0
    %770 = vmatpush1.bf16.msra.mxu0 0
    %771 = vmatprep.subr.bf16.mxu0 0
    %772 = vmatpush1.bf16.msra.mxu0 0
    %773 = vmatprep.subr.bf16.mxu0 0
    %774 = vmatpush1.bf16.msra.mxu0 0
    %775 = vmatprep.mubr.bf16.mxu0 0
    %776 = vmatmul.mubr.bf16.gmra.mrb[0].mxu0 %v741
    %v777 = vpop.f32.mrb[0].mxu0
    %v778 = vadd.f32 %v140, %v777
    %v779 = vpop.f32.mrb[0].mxu0
    %v780 = vpop.f32.mrb[0].mxu0
    %v781 = vpop.f32.mrb[0].mxu0
    %782 = vdwg.mxu0
    %v783 = vmax.f32 %v778, 0.0
    %v784 = vpack.c.bf16 %v783, %v783
    %785 = vmatprep.subr.bf16.mxu0 %v419
    %786 = vmatpush1.bf16.msra.mxu0 %v418
    %787 = vmatprep.subr.bf16.mxu0 %v423
    %788 = vmatpush1.bf16.msra.mxu0 %v422
    %789 = vmatprep.subr.bf16.mxu0 %v427
    %790 = vmatpush1.bf16.msra.mxu0 %v426
    %791 = vmatprep.subr.bf16.mxu0 %v431
    %792 = vmatpush1.bf16.msra.mxu0 %v430
    %793 = vmatprep.subr.bf16.mxu0 %v435
    %794 = vmatpush1.bf16.msra.mxu0 %v434
    %795 = vmatprep.subr.bf16.mxu0 %v439
    %796 = vmatpush1.bf16.msra.mxu0 %v438
    %797 = vmatprep.subr.bf16.mxu0 %v443
    %798 = vmatpush1.bf16.msra.mxu0 %v442
    %799 = vmatprep.subr.bf16.mxu0 %v447
    %800 = vmatpush1.bf16.msra.mxu0 %v446
    %801 = vmatprep.subr.bf16.mxu0 %v451
    %802 = vmatpush1.bf16.msra.mxu0 %v450
    %803 = vmatprep.subr.bf16.mxu0 %v455
    %804 = vmatpush1.bf16.msra.mxu0 %v454
    %805 = vmatprep.subr.bf16.mxu0 %v459
    %806 = vmatpush1.bf16.msra.mxu0 %v458
    %807 = vmatprep.subr.bf16.mxu0 %v463
    %808 = vmatpush1.bf16.msra.mxu0 %v462
    %809 = vmatprep.subr.bf16.mxu0 %v467
    %810 = vmatpush1.bf16.msra.mxu0 %v466
    %811 = vmatprep.subr.bf16.mxu0 %v471
    %812 = vmatpush1.bf16.msra.mxu0 %v470
    %813 = vmatprep.subr.bf16.mxu0 %v475
    %814 = vmatpush1.bf16.msra.mxu0 %v474
    %815 = vmatprep.subr.bf16.mxu0 %v479
    %816 = vmatpush1.bf16.msra.mxu0 %v478
    %817 = vmatprep.mubr.bf16.mxu0 %v647
    %818 = vmatmul.mubr.bf16.gmra.mrb[0].mxu0 %v784
    %v819 = vpop.f32.mrb[0].mxu0
    %v820 = vadd.f32 %v147, %v819
    %v821 = vpop.f32.mrb[0].mxu0
    %v822 = vadd.f32 %v151, %v821
    %v823 = vpop.f32.mrb[0].mxu0
    %v824 = vpop.f32.mrb[0].mxu0
    %825 = vdwg.mxu0
    %826 = vmatprep.subr.bf16.mxu0 %v421
    %827 = vmatpush1.bf16.msra.mxu0 %v420
    %828 = vmatprep.subr.bf16.mxu0 %v425
    %829 = vmatpush1.bf16.msra.mxu0 %v424
    %830 = vmatprep.subr.bf16.mxu0 %v429
    %831 = vmatpush1.bf16.msra.mxu0 %v428
    %832 = vmatprep.subr.bf16.mxu0 %v433
    %833 = vmatpush1.bf16.msra.mxu0 %v432
    %834 = vmatprep.subr.bf16.mxu0 %v437
    %835 = vmatpush1.bf16.msra.mxu0 %v436
    %836 = vmatprep.subr.bf16.mxu0 %v441
    %837 = vmatpush1.bf16.msra.mxu0 %v440
    %838 = vmatprep.subr.bf16.mxu0 %v445
    %839 = vmatpush1.bf16.msra.mxu0 %v444
    %840 = vmatprep.subr.bf16.mxu0 %v449
    %841 = vmatpush1.bf16.msra.mxu0 %v448
    %842 = vmatprep.subr.bf16.mxu0 %v453
    %843 = vmatpush1.bf16.msra.mxu0 %v452
    %844 = vmatprep.subr.bf16.mxu0 %v457
    %845 = vmatpush1.bf16.msra.mxu0 %v456
    %846 = vmatprep.subr.bf16.mxu0 %v461
    %847 = vmatpush1.bf16.msra.mxu0 %v460
    %848 = vmatprep.subr.bf16.mxu0 %v465
    %849 = vmatpush1.bf16.msra.mxu0 %v464
    %850 = vmatprep.subr.bf16.mxu0 %v469
    %851 = vmatpush1.bf16.msra.mxu0 %v468
    %852 = vmatprep.subr.bf16.mxu0 %v473
    %853 = vmatpush1.bf16.msra.mxu0 %v472
    %854 = vmatprep.subr.bf16.mxu0 %v477
    %855 = vmatpush1.bf16.msra.mxu0 %v476
    %856 = vmatprep.subr.bf16.mxu0 %v481
    %857 = vmatpush1.bf16.msra.mxu0 %v480
    %858 = vmatprep.mubr.bf16.mxu0 %v647
    %859 = vmatmul.mubr.bf16.gmra.mrb[0].mxu0 %v784
    %v860 = vpop.f32.mrb[0].mxu0
    %v861 = vadd.f32 %v155, %v860
    %v862 = vpop.f32.mrb[0].mxu0
    %v863 = vadd.f32 %v159, %v862
    %v864 = vpop.f32.mrb[0].mxu0
    %v865 = vpop.f32.mrb[0].mxu0
    %866 = vdwg.mxu0
    %v867 = vxor.u32 %v820, 2147483648
    %v868 = vmul.f32 %v867, 1.442695
    %v869 = vpow.pop %v868
    %v870 = vadd.f32 %v869, 1.0
    %v871 = vrcp.pop %v870
    %v872 = vmul.f32 1.0, %v871
    %v873 = vxor.u32 %v822, 2147483648
    %v874 = vmul.f32 %v873, 1.442695
    %v875 = vpow.pop %v874
    %v876 = vadd.f32 %v875, 1.0
    %v877 = vrcp.pop %v876
    %v878 = vmul.f32 1.0, %v877
    %v879 = vmul.f32 %v872, %v863
    %v880 = vadd.f32 %v861, %v879
    %v881 = vtanh.pop %v880
    %v882 = vsub.f32 1.0, %v878
    %v883 = vmul.f32 %v882, %v881
    %v884 = vmul.f32 %v878, %v646
    %v885 = vadd.f32 %v883, %v884
    %v886 = vpack.c.bf16 %v885, %v885
    %887 = vmatprep.subr.bf16.mxu0 0
    %888 = vmatpush1.bf16.msra.mxu0 %v680
    %889 = vmatprep.subr.bf16.mxu0 0
    %890 = vmatpush1.bf16.msra.mxu0 %v681
    %891 = vmatprep.subr.bf16.mxu0 0
    %892 = vmatpush1.bf16.msra.mxu0 %v682
    %893 = vmatprep.subr.bf16.mxu0 0
    %894 = vmatpush1.bf16.msra.mxu0 %v683
    %895 = vmatprep.subr.bf16.mxu0 0
    %896 = vmatpush1.bf16.msra.mxu0 %v684
    %897 = vmatprep.subr.bf16.mxu0 0
    %898 = vmatpush1.bf16.msra.mxu0 %v685
    %899 = vmatprep.subr.bf16.mxu0 0
    %900 = vmatpush1.bf16.msra.mxu0 %v686
    %901 = vmatprep.subr.bf16.mxu0 0
    %902 = vmatpush1.bf16.msra.mxu0 %v687
    %903 = vmatprep.subr.bf16.mxu0 0
    %904 = vmatpush1.bf16.msra.mxu0 0
    %905 = vmatprep.subr.bf16.mxu0 0
    %906 = vmatpush1.bf16.msra.mxu0 0
    %907 = vmatprep.subr.bf16.mxu0 0
    %908 = vmatpush1.bf16.msra.mxu0 0
    %909 = vmatprep.subr.bf16.mxu0 0
    %910 = vmatpush1.bf16.msra.mxu0 0
    %911 = vmatprep.subr.bf16.mxu0 0
    %912 = vmatpush1.bf16.msra.mxu0 0
    %913 = vmatprep.subr.bf16.mxu0 0
    %914 = vmatpush1.bf16.msra.mxu0 0
    %915 = vmatprep.subr.bf16.mxu0 0
    %916 = vmatpush1.bf16.msra.mxu0 0
    %917 = vmatprep.subr.bf16.mxu0 0
    %918 = vmatpush1.bf16.msra.mxu0 0
    %919 = vmatprep.mubr.bf16.mxu0 0
    %920 = vmatmul.mubr.bf16.gmra.mrb[0].mxu0 %v886
    %v921 = vpop.f32.mrb[0].mxu0
    %v922 = vadd.f32 %v169, %v921
    %v923 = vpop.f32.mrb[0].mxu0
    %v924 = vpop.f32.mrb[0].mxu0
    %v925 = vpop.f32.mrb[0].mxu0
    %926 = vdwg.mxu0
    %v927 = vpack.c.bf16 %v922, %v922
    %s928 = scalar_lea.vmem %s8, 4
    %929 = vst [vmem:[%s928] sm:$0xf] %v927
    %s930 = scalar_lea.vmem %s0, 8
    %v931 = vld [vmem:[%s930] sm:$0xf]
    %v933 = vsel %vm179, %v931, 0
    %935 = vmatprep.subr.bf16.mxu0 0
    %936 = vmatpush1.bf16.msra.mxu0 %v177
    %937 = vmatprep.subr.bf16.mxu0 0
    %938 = vmatpush1.bf16.msra.mxu0 0
    %939 = vmatprep.subr.bf16.mxu0 0
    %940 = vmatpush1.bf16.msra.mxu0 0
    %941 = vmatprep.subr.bf16.mxu0 0
    %942 = vmatpush1.bf16.msra.mxu0 0
    %943 = vmatprep.subr.bf16.mxu0 0
    %944 = vmatpush1.bf16.msra.mxu0 0
    %945 = vmatprep.subr.bf16.mxu0 0
    %946 = vmatpush1.bf16.msra.mxu0 0
    %947 = vmatprep.subr.bf16.mxu0 0
    %948 = vmatpush1.bf16.msra.mxu0 0
    %949 = vmatprep.subr.bf16.mxu0 0
    %950 = vmatpush1.bf16.msra.mxu0 0
    %951 = vmatprep.subr.bf16.mxu0 0
    %952 = vmatpush1.bf16.msra.mxu0 0
    %953 = vmatprep.subr.bf16.mxu0 0
    %954 = vmatpush1.bf16.msra.mxu0 0
    %955 = vmatprep.subr.bf16.mxu0 0
    %956 = vmatpush1.bf16.msra.mxu0 0
    %957 = vmatprep.subr.bf16.mxu0 0
    %958 = vmatpush1.bf16.msra.mxu0 0
    %959 = vmatprep.subr.bf16.mxu0 0
    %960 = vmatpush1.bf16.msra.mxu0 0
    %961 = vmatprep.subr.bf16.mxu0 0
    %962 = vmatpush1.bf16.msra.mxu0 0
    %963 = vmatprep.subr.bf16.mxu0 0
    %964 = vmatpush1.bf16.msra.mxu0 0
    %965 = vmatprep.subr.bf16.mxu0 0
    %966 = vmatpush1.bf16.msra.mxu0 0
    %967 = vmatprep.mubr.bf16.mxu0 0
    %968 = vmatmul.mubr.bf16.gmra.mrb[0].mxu0 %v933
    %v969 = vpop.f32.mrb[0].mxu0
    %v970 = vadd.f32 %v140, %v969
    %v971 = vpop.f32.mrb[0].mxu0
    %v972 = vpop.f32.mrb[0].mxu0
    %v973 = vpop.f32.mrb[0].mxu0
    %974 = vdwg.mxu0
    %v975 = vmax.f32 %v970, 0.0
    %v976 = vpack.c.bf16 %v975, %v975
    %977 = vmatprep.subr.bf16.mxu0 %v419
    %978 = vmatpush1.bf16.msra.mxu0 %v418
    %979 = vmatprep.subr.bf16.mxu0 %v423
    %980 = vmatpush1.bf16.msra.mxu0 %v422
    %981 = vmatprep.subr.bf16.mxu0 %v427
    %982 = vmatpush1.bf16.msra.mxu0 %v426
    %983 = vmatprep.subr.bf16.mxu0 %v431
    %984 = vmatpush1.bf16.msra.mxu0 %v430
    %985 = vmatprep.subr.bf16.mxu0 %v435
    %986 = vmatpush1.bf16.msra.mxu0 %v434
    %987 = vmatprep.subr.bf16.mxu0 %v439
    %988 = vmatpush1.bf16.msra.mxu0 %v438
    %989 = vmatprep.subr.bf16.mxu0 %v443
    %990 = vmatpush1.bf16.msra.mxu0 %v442
    %991 = vmatprep.subr.bf16.mxu0 %v447
    %992 = vmatpush1.bf16.msra.mxu0 %v446
    %993 = vmatprep.subr.bf16.mxu0 %v451
    %994 = vmatpush1.bf16.msra.mxu0 %v450
    %995 = vmatprep.subr.bf16.mxu0 %v455
    %996 = vmatpush1.bf16.msra.mxu0 %v454
    %997 = vmatprep.subr.bf16.mxu0 %v459
    %998 = vmatpush1.bf16.msra.mxu0 %v458
    %999 = vmatprep.subr.bf16.mxu0 %v463
    %1000 = vmatpush1.bf16.msra.mxu0 %v462
    %1001 = vmatprep.subr.bf16.mxu0 %v467
    %1002 = vmatpush1.bf16.msra.mxu0 %v466
    %1003 = vmatprep.subr.bf16.mxu0 %v471
    %1004 = vmatpush1.bf16.msra.mxu0 %v470
    %1005 = vmatprep.subr.bf16.mxu0 %v475
    %1006 = vmatpush1.bf16.msra.mxu0 %v474
    %1007 = vmatprep.subr.bf16.mxu0 %v479
    %1008 = vmatpush1.bf16.msra.mxu0 %v478
    %1009 = vmatprep.mubr.bf16.mxu0 %v886
    %1010 = vmatmul.mubr.bf16.gmra.mrb[0].mxu0 %v976
    %v1011 = vpop.f32.mrb[0].mxu0
    %v1012 = vadd.f32 %v147, %v1011
    %v1013 = vpop.f32.mrb[0].mxu0
    %v1014 = vadd.f32 %v151, %v1013
    %v1015 = vpop.f32.mrb[0].mxu0
    %v1016 = vpop.f32.mrb[0].mxu0
    %1017 = vdwg.mxu0
    %1018 = vmatprep.subr.bf16.mxu0 %v421
    %1019 = vmatpush1.bf16.msra.mxu0 %v420
    %1020 = vmatprep.subr.bf16.mxu0 %v425
    %1021 = vmatpush1.bf16.msra.mxu0 %v424
    %1022 = vmatprep.subr.bf16.mxu0 %v429
    %1023 = vmatpush1.bf16.msra.mxu0 %v428
    %1024 = vmatprep.subr.bf16.mxu0 %v433
    %1025 = vmatpush1.bf16.msra.mxu0 %v432
    %1026 = vmatprep.subr.bf16.mxu0 %v437
    %1027 = vmatpush1.bf16.msra.mxu0 %v436
    %1028 = vmatprep.subr.bf16.mxu0 %v441
    %1029 = vmatpush1.bf16.msra.mxu0 %v440
    %1030 = vmatprep.subr.bf16.mxu0 %v445
    %1031 = vmatpush1.bf16.msra.mxu0 %v444
    %1032 = vmatprep.subr.bf16.mxu0 %v449
    %1033 = vmatpush1.bf16.msra.mxu0 %v448
    %1034 = vmatprep.subr.bf16.mxu0 %v453
    %1035 = vmatpush1.bf16.msra.mxu0 %v452
    %1036 = vmatprep.subr.bf16.mxu0 %v457
    %1037 = vmatpush1.bf16.msra.mxu0 %v456
    %1038 = vmatprep.subr.bf16.mxu0 %v461
    %1039 = vmatpush1.bf16.msra.mxu0 %v460
    %1040 = vmatprep.subr.bf16.mxu0 %v465
    %1041 = vmatpush1.bf16.msra.mxu0 %v464
    %1042 = vmatprep.subr.bf16.mxu0 %v469
    %1043 = vmatpush1.bf16.msra.mxu0 %v468
    %1044 = vmatprep.subr.bf16.mxu0 %v473
    %1045 = vmatpush1.bf16.msra.mxu0 %v472
    %1046 = vmatprep.subr.bf16.mxu0 %v477
    %1047 = vmatpush1.bf16.msra.mxu0 %v476
    %1048 = vmatprep.subr.bf16.mxu0 %v481
    %1049 = vmatpush1.bf16.msra.mxu0 %v480
    %1050 = vmatprep.mubr.bf16.mxu0 %v886
    %1051 = vmatmul.mubr.bf16.gmra.mrb[0].mxu0 %v976
    %v1052 = vpop.f32.mrb[0].mxu0
    %v1053 = vadd.f32 %v155, %v1052
    %v1054 = vpop.f32.mrb[0].mxu0
    %v1055 = vadd.f32 %v159, %v1054
    %v1056 = vpop.f32.mrb[0].mxu0
    %v1057 = vpop.f32.mrb[0].mxu0
    %1058 = vdwg.mxu0
    %v1059 = vxor.u32 %v1012, 2147483648
    %v1060 = vmul.f32 %v1059, 1.442695
    %v1061 = vpow.pop %v1060
    %v1062 = vadd.f32 %v1061, 1.0
    %v1063 = vrcp.pop %v1062
    %v1064 = vmul.f32 1.0, %v1063
    %v1065 = vxor.u32 %v1014, 2147483648
    %v1066 = vmul.f32 %v1065, 1.442695
    %v1067 = vpow.pop %v1066
    %v1068 = vadd.f32 %v1067, 1.0
    %v1069 = vrcp.pop %v1068
    %v1070 = vmul.f32 1.0, %v1069
    %v1071 = vmul.f32 %v1064, %v1055
    %v1072 = vadd.f32 %v1053, %v1071
    %v1073 = vtanh.pop %v1072
    %v1074 = vsub.f32 1.0, %v1070
    %v1075 = vmul.f32 %v1074, %v1073
    %v1076 = vmul.f32 %v1070, %v885
    %v1077 = vadd.f32 %v1075, %v1076
    %v1078 = vpack.c.bf16 %v1077, %v1077
    %1079 = vmatprep.subr.bf16.mxu0 0
    %1080 = vmatpush1.bf16.msra.mxu0 %v680
    %1081 = vmatprep.subr.bf16.mxu0 0
    %1082 = vmatpush1.bf16.msra.mxu0 %v681
    %1083 = vmatprep.subr.bf16.mxu0 0
    %1084 = vmatpush1.bf16.msra.mxu0 %v682
    %1085 = vmatprep.subr.bf16.mxu0 0
    %1086 = vmatpush1.bf16.msra.mxu0 %v683
    %1087 = vmatprep.subr.bf16.mxu0 0
    %1088 = vmatpush1.bf16.msra.mxu0 %v684
    %1089 = vmatprep.subr.bf16.mxu0 0
    %1090 = vmatpush1.bf16.msra.mxu0 %v685
    %1091 = vmatprep.subr.bf16.mxu0 0
    %1092 = vmatpush1.bf16.msra.mxu0 %v686
    %1093 = vmatprep.subr.bf16.mxu0 0
    %1094 = vmatpush1.bf16.msra.mxu0 %v687
    %1095 = vmatprep.subr.bf16.mxu0 0
    %1096 = vmatpush1.bf16.msra.mxu0 0
    %1097 = vmatprep.subr.bf16.mxu0 0
    %1098 = vmatpush1.bf16.msra.mxu0 0
    %1099 = vmatprep.subr.bf16.mxu0 0
    %1100 = vmatpush1.bf16.msra.mxu0 0
    %1101 = vmatprep.subr.bf16.mxu0 0
    %1102 = vmatpush1.bf16.msra.mxu0 0
    %1103 = vmatprep.subr.bf16.mxu0 0
    %1104 = vmatpush1.bf16.msra.mxu0 0
    %1105 = vmatprep.subr.bf16.mxu0 0
    %1106 = vmatpush1.bf16.msra.mxu0 0
    %1107 = vmatprep.subr.bf16.mxu0 0
    %1108 = vmatpush1.bf16.msra.mxu0 0
    %1109 = vmatprep.subr.bf16.mxu0 0
    %1110 = vmatpush1.bf16.msra.mxu0 0
    %1111 = vmatprep.mubr.bf16.mxu0 0
    %1112 = vmatmul.mubr.bf16.gmra.mrb[0].mxu0 %v1078
    %v1113 = vpop.f32.mrb[0].mxu0
    %v1114 = vadd.f32 %v169, %v1113
    %v1115 = vpop.f32.mrb[0].mxu0
    %v1116 = vpop.f32.mrb[0].mxu0
    %v1117 = vpop.f32.mrb[0].mxu0
    %1118 = vdwg.mxu0
    %v1119 = vpack.c.bf16 %v1114, %v1114
    %s1120 = scalar_lea.vmem %s8, 8
    %1121 = vst [vmem:[%s1120] sm:$0xf] %v1119
    %s1122 = scalar_lea.vmem %s0, 12
    %v1123 = vld [vmem:[%s1122] sm:$0xf]
    %v1125 = vsel %vm179, %v1123, 0
    %1127 = vmatprep.subr.bf16.mxu0 0
    %1128 = vmatpush1.bf16.msra.mxu0 %v177
    %1129 = vmatprep.subr.bf16.mxu0 0
    %1130 = vmatpush1.bf16.msra.mxu0 0
    %1131 = vmatprep.subr.bf16.mxu0 0
    %1132 = vmatpush1.bf16.msra.mxu0 0
    %1133 = vmatprep.subr.bf16.mxu0 0
    %1134 = vmatpush1.bf16.msra.mxu0 0
    %1135 = vmatprep.subr.bf16.mxu0 0
    %1136 = vmatpush1.bf16.msra.mxu0 0
    %1137 = vmatprep.subr.bf16.mxu0 0
    %1138 = vmatpush1.bf16.msra.mxu0 0
    %1139 = vmatprep.subr.bf16.mxu0 0
    %1140 = vmatpush1.bf16.msra.mxu0 0
    %1141 = vmatprep.subr.bf16.mxu0 0
    %1142 = vmatpush1.bf16.msra.mxu0 0
    %1143 = vmatprep.subr.bf16.mxu0 0
    %1144 = vmatpush1.bf16.msra.mxu0 0
    %1145 = vmatprep.subr.bf16.mxu0 0
    %1146 = vmatpush1.bf16.msra.mxu0 0
    %1147 = vmatprep.subr.bf16.mxu0 0
    %1148 = vmatpush1.bf16.msra.mxu0 0
    %1149 = vmatprep.subr.bf16.mxu0 0
    %1150 = vmatpush1.bf16.msra.mxu0 0
    %1151 = vmatprep.subr.bf16.mxu0 0
    %1152 = vmatpush1.bf16.msra.mxu0 0
    %1153 = vmatprep.subr.bf16.mxu0 0
    %1154 = vmatpush1.bf16.msra.mxu0 0
    %1155 = vmatprep.subr.bf16.mxu0 0
    %1156 = vmatpush1.bf16.msra.mxu0 0
    %1157 = vmatprep.subr.bf16.mxu0 0
    %1158 = vmatpush1.bf16.msra.mxu0 0
    %1159 = vmatprep.mubr.bf16.mxu0 0
    %1160 = vmatmul.mubr.bf16.gmra.mrb[0].mxu0 %v1125
    %v1161 = vpop.f32.mrb[0].mxu0
    %v1162 = vadd.f32 %v140, %v1161
    %v1163 = vpop.f32.mrb[0].mxu0
    %v1164 = vpop.f32.mrb[0].mxu0
    %v1165 = vpop.f32.mrb[0].mxu0
    %1166 = vdwg.mxu0
    %v1167 = vmax.f32 %v1162, 0.0
    %v1168 = vpack.c.bf16 %v1167, %v1167
    %1169 = vmatprep.subr.bf16.mxu0 %v419
    %1170 = vmatpush1.bf16.msra.mxu0 %v418
    %1171 = vmatprep.subr.bf16.mxu0 %v423
    %1172 = vmatpush1.bf16.msra.mxu0 %v422
    %1173 = vmatprep.subr.bf16.mxu0 %v427
    %1174 = vmatpush1.bf16.msra.mxu0 %v426
    %1175 = vmatprep.subr.bf16.mxu0 %v431
    %1176 = vmatpush1.bf16.msra.mxu0 %v430
    %1177 = vmatprep.subr.bf16.mxu0 %v435
    %1178 = vmatpush1.bf16.msra.mxu0 %v434
    %1179 = vmatprep.subr.bf16.mxu0 %v439
    %1180 = vmatpush1.bf16.msra.mxu0 %v438
    %1181 = vmatprep.subr.bf16.mxu0 %v443
    %1182 = vmatpush1.bf16.msra.mxu0 %v442
    %1183 = vmatprep.subr.bf16.mxu0 %v447
    %1184 = vmatpush1.bf16.msra.mxu0 %v446
    %1185 = vmatprep.subr.bf16.mxu0 %v451
    %1186 = vmatpush1.bf16.msra.mxu0 %v450
    %1187 = vmatprep.subr.bf16.mxu0 %v455
    %1188 = vmatpush1.bf16.msra.mxu0 %v454
    %1189 = vmatprep.subr.bf16.mxu0 %v459
    %1190 = vmatpush1.bf16.msra.mxu0 %v458
    %1191 = vmatprep.subr.bf16.mxu0 %v463
    %1192 = vmatpush1.bf16.msra.mxu0 %v462
    %1193 = vmatprep.subr.bf16.mxu0 %v467
    %1194 = vmatpush1.bf16.msra.mxu0 %v466
    %1195 = vmatprep.subr.bf16.mxu0 %v471
    %1196 = vmatpush1.bf16.msra.mxu0 %v470
    %1197 = vmatprep.subr.bf16.mxu0 %v475
    %1198 = vmatpush1.bf16.msra.mxu0 %v474
    %1199 = vmatprep.subr.bf16.mxu0 %v479
    %1200 = vmatpush1.bf16.msra.mxu0 %v478
    %1201 = vmatprep.mubr.bf16.mxu0 %v1078
    %1202 = vmatmul.mubr.bf16.gmra.mrb[0].mxu0 %v1168
    %v1203 = vpop.f32.mrb[0].mxu0
    %v1204 = vadd.f32 %v147, %v1203
    %v1205 = vpop.f32.mrb[0].mxu0
    %v1206 = vadd.f32 %v151, %v1205
    %v1207 = vpop.f32.mrb[0].mxu0
    %v1208 = vpop.f32.mrb[0].mxu0
    %1209 = vdwg.mxu0
    %1210 = vmatprep.subr.bf16.mxu0 %v421
    %1211 = vmatpush1.bf16.msra.mxu0 %v420
    %1212 = vmatprep.subr.bf16.mxu0 %v425
    %1213 = vmatpush1.bf16.msra.mxu0 %v424
    %1214 = vmatprep.subr.bf16.mxu0 %v429
    %1215 = vmatpush1.bf16.msra.mxu0 %v428
    %1216 = vmatprep.subr.bf16.mxu0 %v433
    %1217 = vmatpush1.bf16.msra.mxu0 %v432
    %1218 = vmatprep.subr.bf16.mxu0 %v437
    %1219 = vmatpush1.bf16.msra.mxu0 %v436
    %1220 = vmatprep.subr.bf16.mxu0 %v441
    %1221 = vmatpush1.bf16.msra.mxu0 %v440
    %1222 = vmatprep.subr.bf16.mxu0 %v445
    %1223 = vmatpush1.bf16.msra.mxu0 %v444
    %1224 = vmatprep.subr.bf16.mxu0 %v449
    %1225 = vmatpush1.bf16.msra.mxu0 %v448
    %1226 = vmatprep.subr.bf16.mxu0 %v453
    %1227 = vmatpush1.bf16.msra.mxu0 %v452
    %1228 = vmatprep.subr.bf16.mxu0 %v457
    %1229 = vmatpush1.bf16.msra.mxu0 %v456
    %1230 = vmatprep.subr.bf16.mxu0 %v461
    %1231 = vmatpush1.bf16.msra.mxu0 %v460
    %1232 = vmatprep.subr.bf16.mxu0 %v465
    %1233 = vmatpush1.bf16.msra.mxu0 %v464
    %1234 = vmatprep.subr.bf16.mxu0 %v469
    %1235 = vmatpush1.bf16.msra.mxu0 %v468
    %1236 = vmatprep.subr.bf16.mxu0 %v473
    %1237 = vmatpush1.bf16.msra.mxu0 %v472
    %1238 = vmatprep.subr.bf16.mxu0 %v477
    %1239 = vmatpush1.bf16.msra.mxu0 %v476
    %1240 = vmatprep.subr.bf16.mxu0 %v481
    %1241 = vmatpush1.bf16.msra.mxu0 %v480
    %1242 = vmatprep.mubr.bf16.mxu0 %v1078
    %1243 = vmatmul.mubr.bf16.gmra.mrb[0].mxu0 %v1168
    %v1244 = vpop.f32.mrb[0].mxu0
    %v1245 = vadd.f32 %v155, %v1244
    %v1246 = vpop.f32.mrb[0].mxu0
    %v1247 = vadd.f32 %v159, %v1246
    %v1248 = vpop.f32.mrb[0].mxu0
    %v1249 = vpop.f32.mrb[0].mxu0
    %1250 = vdwg.mxu0
    %v1251 = vxor.u32 %v1204, 2147483648
    %v1252 = vmul.f32 %v1251, 1.442695
    %v1253 = vpow.pop %v1252
    %v1254 = vadd.f32 %v1253, 1.0
    %v1255 = vrcp.pop %v1254
    %v1256 = vmul.f32 1.0, %v1255
    %v1257 = vxor.u32 %v1206, 2147483648
    %v1258 = vmul.f32 %v1257, 1.442695
    %v1259 = vpow.pop %v1258
    %v1260 = vadd.f32 %v1259, 1.0
    %v1261 = vrcp.pop %v1260
    %v1262 = vmul.f32 1.0, %v1261
    %v1263 = vmul.f32 %v1256, %v1247
    %v1264 = vadd.f32 %v1245, %v1263
    %v1265 = vtanh.pop %v1264
    %v1266 = vsub.f32 1.0, %v1262
    %v1267 = vmul.f32 %v1266, %v1265
    %v1268 = vmul.f32 %v1262, %v1077
    %v1269 = vadd.f32 %v1267, %v1268
    %v1270 = vpack.c.bf16 %v1269, %v1269
    %1271 = vmatprep.subr.bf16.mxu0 0
    %1272 = vmatpush1.bf16.msra.mxu0 %v680
    %1273 = vmatprep.subr.bf16.mxu0 0
    %1274 = vmatpush1.bf16.msra.mxu0 %v681
    %1275 = vmatprep.subr.bf16.mxu0 0
    %1276 = vmatpush1.bf16.msra.mxu0 %v682
    %1277 = vmatprep.subr.bf16.mxu0 0
    %1278 = vmatpush1.bf16.msra.mxu0 %v683
    %1279 = vmatprep.subr.bf16.mxu0 0
    %1280 = vmatpush1.bf16.msra.mxu0 %v684
    %1281 = vmatprep.subr.bf16.mxu0 0
    %1282 = vmatpush1.bf16.msra.mxu0 %v685
    %1283 = vmatprep.subr.bf16.mxu0 0
    %1284 = vmatpush1.bf16.msra.mxu0 %v686
    %1285 = vmatprep.subr.bf16.mxu0 0
    %1286 = vmatpush1.bf16.msra.mxu0 %v687
    %1287 = vmatprep.subr.bf16.mxu0 0
    %1288 = vmatpush1.bf16.msra.mxu0 0
    %1289 = vmatprep.subr.bf16.mxu0 0
    %1290 = vmatpush1.bf16.msra.mxu0 0
    %1291 = vmatprep.subr.bf16.mxu0 0
    %1292 = vmatpush1.bf16.msra.mxu0 0
    %1293 = vmatprep.subr.bf16.mxu0 0
    %1294 = vmatpush1.bf16.msra.mxu0 0
    %1295 = vmatprep.subr.bf16.mxu0 0
    %1296 = vmatpush1.bf16.msra.mxu0 0
    %1297 = vmatprep.subr.bf16.mxu0 0
    %1298 = vmatpush1.bf16.msra.mxu0 0
    %1299 = vmatprep.subr.bf16.mxu0 0
    %1300 = vmatpush1.bf16.msra.mxu0 0
    %1301 = vmatprep.subr.bf16.mxu0 0
    %1302 = vmatpush1.bf16.msra.mxu0 0
    %1303 = vmatprep.mubr.bf16.mxu0 0
    %1304 = vmatmul.mubr.bf16.gmra.mrb[0].mxu0 %v1270
    %v1305 = vpop.f32.mrb[0].mxu0
    %v1306 = vadd.f32 %v169, %v1305
    %v1307 = vpop.f32.mrb[0].mxu0
    %v1308 = vpop.f32.mrb[0].mxu0
    %v1309 = vpop.f32.mrb[0].mxu0
    %1310 = vdwg.mxu0
    %v1311 = vpack.c.bf16 %v1306, %v1306
    %s1312 = scalar_lea.vmem %s8, 12
    %1313 = vst [vmem:[%s1312] sm:$0xf] %v1311
    %s1314 = scalar_lea.vmem %s0, 16
    %v1315 = vld [vmem:[%s1314] sm:$0xf]
    %v1317 = vsel %vm179, %v1315, 0
    %1319 = vmatprep.subr.bf16.mxu0 0
    %1320 = vmatpush1.bf16.msra.mxu0 %v177
    %1321 = vmatprep.subr.bf16.mxu0 0
    %1322 = vmatpush1.bf16.msra.mxu0 0
    %1323 = vmatprep.subr.bf16.mxu0 0
    %1324 = vmatpush1.bf16.msra.mxu0 0
    %1325 = vmatprep.subr.bf16.mxu0 0
    %1326 = vmatpush1.bf16.msra.mxu0 0
    %1327 = vmatprep.subr.bf16.mxu0 0
    %1328 = vmatpush1.bf16.msra.mxu0 0
    %1329 = vmatprep.subr.bf16.mxu0 0
    %1330 = vmatpush1.bf16.msra.mxu0 0
    %1331 = vmatprep.subr.bf16.mxu0 0
    %1332 = vmatpush1.bf16.msra.mxu0 0
    %1333 = vmatprep.subr.bf16.mxu0 0
    %1334 = vmatpush1.bf16.msra.mxu0 0
    %1335 = vmatprep.subr.bf16.mxu0 0
    %1336 = vmatpush1.bf16.msra.mxu0 0
    %1337 = vmatprep.subr.bf16.mxu0 0
    %1338 = vmatpush1.bf16.msra.mxu0 0
    %1339 = vmatprep.subr.bf16.mxu0 0
    %1340 = vmatpush1.bf16.msra.mxu0 0
    %1341 = vmatprep.subr.bf16.mxu0 0
    %1342 = vmatpush1.bf16.msra.mxu0 0
    %1343 = vmatprep.subr.bf16.mxu0 0
    %1344 = vmatpush1.bf16.msra.mxu0 0
    %1345 = vmatprep.subr.bf16.mxu0 0
    %1346 = vmatpush1.bf16.msra.mxu0 0
    %1347 = vmatprep.subr.bf16.mxu0 0
    %1348 = vmatpush1.bf16.msra.mxu0 0
    %1349 = vmatprep.subr.bf16.mxu0 0
    %1350 = vmatpush1.bf16.msra.mxu0 0
    %1351 = vmatprep.mubr.bf16.mxu0 0
    %1352 = vmatmul.mubr.bf16.gmra.mrb[0].mxu0 %v1317
    %v1353 = vpop.f32.mrb[0].mxu0
    %v1354 = vadd.f32 %v140, %v1353
    %v1355 = vpop.f32.mrb[0].mxu0
    %v1356 = vpop.f32.mrb[0].mxu0
    %v1357 = vpop.f32.mrb[0].mxu0
    %1358 = vdwg.mxu0
    %v1359 = vmax.f32 %v1354, 0.0
    %v1360 = vpack.c.bf16 %v1359, %v1359
    %1361 = vmatprep.subr.bf16.mxu0 %v419
    %1362 = vmatpush1.bf16.msra.mxu0 %v418
    %1363 = vmatprep.subr.bf16.mxu0 %v423
    %1364 = vmatpush1.bf16.msra.mxu0 %v422
    %1365 = vmatprep.subr.bf16.mxu0 %v427
    %1366 = vmatpush1.bf16.msra.mxu0 %v426
    %1367 = vmatprep.subr.bf16.mxu0 %v431
    %1368 = vmatpush1.bf16.msra.mxu0 %v430
    %1369 = vmatprep.subr.bf16.mxu0 %v435
    %1370 = vmatpush1.bf16.msra.mxu0 %v434
    %1371 = vmatprep.subr.bf16.mxu0 %v439
    %1372 = vmatpush1.bf16.msra.mxu0 %v438
    %1373 = vmatprep.subr.bf16.mxu0 %v443
    %1374 = vmatpush1.bf16.msra.mxu0 %v442
    %1375 = vmatprep.subr.bf16.mxu0 %v447
    %1376 = vmatpush1.bf16.msra.mxu0 %v446
    %1377 = vmatprep.subr.bf16.mxu0 %v451
    %1378 = vmatpush1.bf16.msra.mxu0 %v450
    %1379 = vmatprep.subr.bf16.mxu0 %v455
    %1380 = vmatpush1.bf16.msra.mxu0 %v454
    %1381 = vmatprep.subr.bf16.mxu0 %v459
    %1382 = vmatpush1.bf16.msra.mxu0 %v458
    %1383 = vmatprep.subr.bf16.mxu0 %v463
    %1384 = vmatpush1.bf16.msra.mxu0 %v462
    %1385 = vmatprep.subr.bf16.mxu0 %v467
    %1386 = vmatpush1.bf16.msra.mxu0 %v466
    %1387 = vmatprep.subr.bf16.mxu0 %v471
    %1388 = vmatpush1.bf16.msra.mxu0 %v470
    %1389 = vmatprep.subr.bf16.mxu0 %v475
    %1390 = vmatpush1.bf16.msra.mxu0 %v474
    %1391 = vmatprep.subr.bf16.mxu0 %v479
    %1392 = vmatpush1.bf16.msra.mxu0 %v478
    %1393 = vmatprep.mubr.bf16.mxu0 %v1270
    %1394 = vmatmul.mubr.bf16.gmra.mrb[0].mxu0 %v1360
    %v1395 = vpop.f32.mrb[0].mxu0
    %v1396 = vadd.f32 %v147, %v1395
    %v1397 = vpop.f32.mrb[0].mxu0
    %v1398 = vadd.f32 %v151, %v1397
    %v1399 = vpop.f32.mrb[0].mxu0
    %v1400 = vpop.f32.mrb[0].mxu0
    %1401 = vdwg.mxu0
    %1402 = vmatprep.subr.bf16.mxu0 %v421
    %1403 = vmatpush1.bf16.msra.mxu0 %v420
    %1404 = vmatprep.subr.bf16.mxu0 %v425
    %1405 = vmatpush1.bf16.msra.mxu0 %v424
    %1406 = vmatprep.subr.bf16.mxu0 %v429
    %1407 = vmatpush1.bf16.msra.mxu0 %v428
    %1408 = vmatprep.subr.bf16.mxu0 %v433
    %1409 = vmatpush1.bf16.msra.mxu0 %v432
    %1410 = vmatprep.subr.bf16.mxu0 %v437
    %1411 = vmatpush1.bf16.msra.mxu0 %v436
    %1412 = vmatprep.subr.bf16.mxu0 %v441
    %1413 = vmatpush1.bf16.msra.mxu0 %v440
    %1414 = vmatprep.subr.bf16.mxu0 %v445
    %1415 = vmatpush1.bf16.msra.mxu0 %v444
    %1416 = vmatprep.subr.bf16.mxu0 %v449
    %1417 = vmatpush1.bf16.msra.mxu0 %v448
    %1418 = vmatprep.subr.bf16.mxu0 %v453
    %1419 = vmatpush1.bf16.msra.mxu0 %v452
    %1420 = vmatprep.subr.bf16.mxu0 %v457
    %1421 = vmatpush1.bf16.msra.mxu0 %v456
    %1422 = vmatprep.subr.bf16.mxu0 %v461
    %1423 = vmatpush1.bf16.msra.mxu0 %v460
    %1424 = vmatprep.subr.bf16.mxu0 %v465
    %1425 = vmatpush1.bf16.msra.mxu0 %v464
    %1426 = vmatprep.subr.bf16.mxu0 %v469
    %1427 = vmatpush1.bf16.msra.mxu0 %v468
    %1428 = vmatprep.subr.bf16.mxu0 %v473
    %1429 = vmatpush1.bf16.msra.mxu0 %v472
    %1430 = vmatprep.subr.bf16.mxu0 %v477
    %1431 = vmatpush1.bf16.msra.mxu0 %v476
    %1432 = vmatprep.subr.bf16.mxu0 %v481
    %1433 = vmatpush1.bf16.msra.mxu0 %v480
    %1434 = vmatprep.mubr.bf16.mxu0 %v1270
    %1435 = vmatmul.mubr.bf16.gmra.mrb[0].mxu0 %v1360
    %v1436 = vpop.f32.mrb[0].mxu0
    %v1437 = vadd.f32 %v155, %v1436
    %v1438 = vpop.f32.mrb[0].mxu0
    %v1439 = vadd.f32 %v159, %v1438
    %v1440 = vpop.f32.mrb[0].mxu0
    %v1441 = vpop.f32.mrb[0].mxu0
    %1442 = vdwg.mxu0
    %v1443 = vxor.u32 %v1396, 2147483648
    %v1444 = vmul.f32 %v1443, 1.442695
    %v1445 = vpow.pop %v1444
    %v1446 = vadd.f32 %v1445, 1.0
    %v1447 = vrcp.pop %v1446
    %v1448 = vmul.f32 1.0, %v1447
    %v1449 = vxor.u32 %v1398, 2147483648
    %v1450 = vmul.f32 %v1449, 1.442695
    %v1451 = vpow.pop %v1450
    %v1452 = vadd.f32 %v1451, 1.0
    %v1453 = vrcp.pop %v1452
    %v1454 = vmul.f32 1.0, %v1453
    %v1455 = vmul.f32 %v1448, %v1439
    %v1456 = vadd.f32 %v1437, %v1455
    %v1457 = vtanh.pop %v1456
    %v1458 = vsub.f32 1.0, %v1454
    %v1459 = vmul.f32 %v1458, %v1457
    %v1460 = vmul.f32 %v1454, %v1269
    %v1461 = vadd.f32 %v1459, %v1460
    %v1462 = vpack.c.bf16 %v1461, %v1461
    %1463 = vmatprep.subr.bf16.mxu0 0
    %1464 = vmatpush1.bf16.msra.mxu0 %v680
    %1465 = vmatprep.subr.bf16.mxu0 0
    %1466 = vmatpush1.bf16.msra.mxu0 %v681
    %1467 = vmatprep.subr.bf16.mxu0 0
    %1468 = vmatpush1.bf16.msra.mxu0 %v682
    %1469 = vmatprep.subr.bf16.mxu0 0
    %1470 = vmatpush1.bf16.msra.mxu0 %v683
    %1471 = vmatprep.subr.bf16.mxu0 0
    %1472 = vmatpush1.bf16.msra.mxu0 %v684
    %1473 = vmatprep.subr.bf16.mxu0 0
    %1474 = vmatpush1.bf16.msra.mxu0 %v685
    %1475 = vmatprep.subr.bf16.mxu0 0
    %1476 = vmatpush1.bf16.msra.mxu0 %v686
    %1477 = vmatprep.subr.bf16.mxu0 0
    %1478 = vmatpush1.bf16.msra.mxu0 %v687
    %1479 = vmatprep.subr.bf16.mxu0 0
    %1480 = vmatpush1.bf16.msra.mxu0 0
    %1481 = vmatprep.subr.bf16.mxu0 0
    %1482 = vmatpush1.bf16.msra.mxu0 0
    %1483 = vmatprep.subr.bf16.mxu0 0
    %1484 = vmatpush1.bf16.msra.mxu0 0
    %1485 = vmatprep.subr.bf16.mxu0 0
    %1486 = vmatpush1.bf16.msra.mxu0 0
    %1487 = vmatprep.subr.bf16.mxu0 0
    %1488 = vmatpush1.bf16.msra.mxu0 0
    %1489 = vmatprep.subr.bf16.mxu0 0
    %1490 = vmatpush1.bf16.msra.mxu0 0
    %1491 = vmatprep.subr.bf16.mxu0 0
    %1492 = vmatpush1.bf16.msra.mxu0 0
    %1493 = vmatprep.subr.bf16.mxu0 0
    %1494 = vmatpush1.bf16.msra.mxu0 0
    %1495 = vmatprep.mubr.bf16.mxu0 0
    %1496 = vmatmul.mubr.bf16.gmra.mrb[0].mxu0 %v1462
    %v1497 = vpop.f32.mrb[0].mxu0
    %v1498 = vadd.f32 %v169, %v1497
    %v1499 = vpop.f32.mrb[0].mxu0
    %v1500 = vpop.f32.mrb[0].mxu0
    %v1501 = vpop.f32.mrb[0].mxu0
    %1502 = vdwg.mxu0
    %v1503 = vpack.c.bf16 %v1498, %v1498
    %s1504 = scalar_lea.vmem %s8, 16
    %1505 = vst [vmem:[%s1504] sm:$0xf] %v1503
    %s1506 = scalar_lea.vmem %s0, 20
    %v1507 = vld [vmem:[%s1506] sm:$0xf]
    %v1509 = vsel %vm179, %v1507, 0
    %1511 = vmatprep.subr.bf16.mxu0 0
    %1512 = vmatpush1.bf16.msra.mxu0 %v177
    %1513 = vmatprep.subr.bf16.mxu0 0
    %1514 = vmatpush1.bf16.msra.mxu0 0
    %1515 = vmatprep.subr.bf16.mxu0 0
    %1516 = vmatpush1.bf16.msra.mxu0 0
    %1517 = vmatprep.subr.bf16.mxu0 0
    %1518 = vmatpush1.bf16.msra.mxu0 0
    %1519 = vmatprep.subr.bf16.mxu0 0
    %1520 = vmatpush1.bf16.msra.mxu0 0
    %1521 = vmatprep.subr.bf16.mxu0 0
    %1522 = vmatpush1.bf16.msra.mxu0 0
    %1523 = vmatprep.subr.bf16.mxu0 0
    %1524 = vmatpush1.bf16.msra.mxu0 0
    %1525 = vmatprep.subr.bf16.mxu0 0
    %1526 = vmatpush1.bf16.msra.mxu0 0
    %1527 = vmatprep.subr.bf16.mxu0 0
    %1528 = vmatpush1.bf16.msra.mxu0 0
    %1529 = vmatprep.subr.bf16.mxu0 0
    %1530 = vmatpush1.bf16.msra.mxu0 0
    %1531 = vmatprep.subr.bf16.mxu0 0
    %1532 = vmatpush1.bf16.msra.mxu0 0
    %1533 = vmatprep.subr.bf16.mxu0 0
    %1534 = vmatpush1.bf16.msra.mxu0 0
    %1535 = vmatprep.subr.bf16.mxu0 0
    %1536 = vmatpush1.bf16.msra.mxu0 0
    %1537 = vmatprep.subr.bf16.mxu0 0
    %1538 = vmatpush1.bf16.msra.mxu0 0
    %1539 = vmatprep.subr.bf16.mxu0 0
    %1540 = vmatpush1.bf16.msra.mxu0 0
    %1541 = vmatprep.subr.bf16.mxu0 0
    %1542 = vmatpush1.bf16.msra.mxu0 0
    %1543 = vmatprep.mubr.bf16.mxu0 0
    %1544 = vmatmul.mubr.bf16.gmra.mrb[0].mxu0 %v1509
    %v1545 = vpop.f32.mrb[0].mxu0
    %v1546 = vadd.f32 %v140, %v1545
    %v1547 = vpop.f32.mrb[0].mxu0
    %v1548 = vpop.f32.mrb[0].mxu0
    %v1549 = vpop.f32.mrb[0].mxu0
    %1550 = vdwg.mxu0
    %v1551 = vmax.f32 %v1546, 0.0
    %v1552 = vpack.c.bf16 %v1551, %v1551
    %1553 = vmatprep.subr.bf16.mxu0 %v419
    %1554 = vmatpush1.bf16.msra.mxu0 %v418
    %1555 = vmatprep.subr.bf16.mxu0 %v423
    %1556 = vmatpush1.bf16.msra.mxu0 %v422
    %1557 = vmatprep.subr.bf16.mxu0 %v427
    %1558 = vmatpush1.bf16.msra.mxu0 %v426
    %1559 = vmatprep.subr.bf16.mxu0 %v431
    %1560 = vmatpush1.bf16.msra.mxu0 %v430
    %1561 = vmatprep.subr.bf16.mxu0 %v435
    %1562 = vmatpush1.bf16.msra.mxu0 %v434
    %1563 = vmatprep.subr.bf16.mxu0 %v439
    %1564 = vmatpush1.bf16.msra.mxu0 %v438
    %1565 = vmatprep.subr.bf16.mxu0 %v443
    %1566 = vmatpush1.bf16.msra.mxu0 %v442
    %1567 = vmatprep.subr.bf16.mxu0 %v447
    %1568 = vmatpush1.bf16.msra.mxu0 %v446
    %1569 = vmatprep.subr.bf16.mxu0 %v451
    %1570 = vmatpush1.bf16.msra.mxu0 %v450
    %1571 = vmatprep.subr.bf16.mxu0 %v455
    %1572 = vmatpush1.bf16.msra.mxu0 %v454
    %1573 = vmatprep.subr.bf16.mxu0 %v459
    %1574 = vmatpush1.bf16.msra.mxu0 %v458
    %1575 = vmatprep.subr.bf16.mxu0 %v463
    %1576 = vmatpush1.bf16.msra.mxu0 %v462
    %1577 = vmatprep.subr.bf16.mxu0 %v467
    %1578 = vmatpush1.bf16.msra.mxu0 %v466
    %1579 = vmatprep.subr.bf16.mxu0 %v471
    %1580 = vmatpush1.bf16.msra.mxu0 %v470
    %1581 = vmatprep.subr.bf16.mxu0 %v475
    %1582 = vmatpush1.bf16.msra.mxu0 %v474
    %1583 = vmatprep.subr.bf16.mxu0 %v479
    %1584 = vmatpush1.bf16.msra.mxu0 %v478
    %1585 = vmatprep.mubr.bf16.mxu0 %v1462
    %1586 = vmatmul.mubr.bf16.gmra.mrb[0].mxu0 %v1552
    %v1587 = vpop.f32.mrb[0].mxu0
    %v1588 = vadd.f32 %v147, %v1587
    %v1589 = vpop.f32.mrb[0].mxu0
    %v1590 = vadd.f32 %v151, %v1589
    %v1591 = vpop.f32.mrb[0].mxu0
    %v1592 = vpop.f32.mrb[0].mxu0
    %1593 = vdwg.mxu0
    %1594 = vmatprep.subr.bf16.mxu0 %v421
    %1595 = vmatpush1.bf16.msra.mxu0 %v420
    %1596 = vmatprep.subr.bf16.mxu0 %v425
    %1597 = vmatpush1.bf16.msra.mxu0 %v424
    %1598 = vmatprep.subr.bf16.mxu0 %v429
    %1599 = vmatpush1.bf16.msra.mxu0 %v428
    %1600 = vmatprep.subr.bf16.mxu0 %v433
    %1601 = vmatpush1.bf16.msra.mxu0 %v432
    %1602 = vmatprep.subr.bf16.mxu0 %v437
    %1603 = vmatpush1.bf16.msra.mxu0 %v436
    %1604 = vmatprep.subr.bf16.mxu0 %v441
    %1605 = vmatpush1.bf16.msra.mxu0 %v440
    %1606 = vmatprep.subr.bf16.mxu0 %v445
    %1607 = vmatpush1.bf16.msra.mxu0 %v444
    %1608 = vmatprep.subr.bf16.mxu0 %v449
    %1609 = vmatpush1.bf16.msra.mxu0 %v448
    %1610 = vmatprep.subr.bf16.mxu0 %v453
    %1611 = vmatpush1.bf16.msra.mxu0 %v452
    %1612 = vmatprep.subr.bf16.mxu0 %v457
    %1613 = vmatpush1.bf16.msra.mxu0 %v456
    %1614 = vmatprep.subr.bf16.mxu0 %v461
    %1615 = vmatpush1.bf16.msra.mxu0 %v460
    %1616 = vmatprep.subr.bf16.mxu0 %v465
    %1617 = vmatpush1.bf16.msra.mxu0 %v464
    %1618 = vmatprep.subr.bf16.mxu0 %v469
    %1619 = vmatpush1.bf16.msra.mxu0 %v468
    %1620 = vmatprep.subr.bf16.mxu0 %v473
    %1621 = vmatpush1.bf16.msra.mxu0 %v472
    %1622 = vmatprep.subr.bf16.mxu0 %v477
    %1623 = vmatpush1.bf16.msra.mxu0 %v476
    %1624 = vmatprep.subr.bf16.mxu0 %v481
    %1625 = vmatpush1.bf16.msra.mxu0 %v480
    %1626 = vmatprep.mubr.bf16.mxu0 %v1462
    %1627 = vmatmul.mubr.bf16.gmra.mrb[0].mxu0 %v1552
    %v1628 = vpop.f32.mrb[0].mxu0
    %v1629 = vadd.f32 %v155, %v1628
    %v1630 = vpop.f32.mrb[0].mxu0
    %v1631 = vadd.f32 %v159, %v1630
    %v1632 = vpop.f32.mrb[0].mxu0
    %v1633 = vpop.f32.mrb[0].mxu0
    %1634 = vdwg.mxu0
    %v1635 = vxor.u32 %v1588, 2147483648
    %v1636 = vmul.f32 %v1635, 1.442695
    %v1637 = vpow.pop %v1636
    %v1638 = vadd.f32 %v1637, 1.0
    %v1639 = vrcp.pop %v1638
    %v1640 = vmul.f32 1.0, %v1639
    %v1641 = vxor.u32 %v1590, 2147483648
    %v1642 = vmul.f32 %v1641, 1.442695
    %v1643 = vpow.pop %v1642
    %v1644 = vadd.f32 %v1643, 1.0
    %v1645 = vrcp.pop %v1644
    %v1646 = vmul.f32 1.0, %v1645
    %v1647 = vmul.f32 %v1640, %v1631
    %v1648 = vadd.f32 %v1629, %v1647
    %v1649 = vtanh.pop %v1648
    %v1650 = vsub.f32 1.0, %v1646
    %v1651 = vmul.f32 %v1650, %v1649
    %v1652 = vmul.f32 %v1646, %v1461
    %v1653 = vadd.f32 %v1651, %v1652
    %v1654 = vpack.c.bf16 %v1653, %v1653
    %1655 = vmatprep.subr.bf16.mxu0 0
    %1656 = vmatpush1.bf16.msra.mxu0 %v680
    %1657 = vmatprep.subr.bf16.mxu0 0
    %1658 = vmatpush1.bf16.msra.mxu0 %v681
    %1659 = vmatprep.subr.bf16.mxu0 0
    %1660 = vmatpush1.bf16.msra.mxu0 %v682
    %1661 = vmatprep.subr.bf16.mxu0 0
    %1662 = vmatpush1.bf16.msra.mxu0 %v683
    %1663 = vmatprep.subr.bf16.mxu0 0
    %1664 = vmatpush1.bf16.msra.mxu0 %v684
    %1665 = vmatprep.subr.bf16.mxu0 0
    %1666 = vmatpush1.bf16.msra.mxu0 %v685
    %1667 = vmatprep.subr.bf16.mxu0 0
    %1668 = vmatpush1.bf16.msra.mxu0 %v686
    %1669 = vmatprep.subr.bf16.mxu0 0
    %1670 = vmatpush1.bf16.msra.mxu0 %v687
    %1671 = vmatprep.subr.bf16.mxu0 0
    %1672 = vmatpush1.bf16.msra.mxu0 0
    %1673 = vmatprep.subr.bf16.mxu0 0
    %1674 = vmatpush1.bf16.msra.mxu0 0
    %1675 = vmatprep.subr.bf16.mxu0 0
    %1676 = vmatpush1.bf16.msra.mxu0 0
    %1677 = vmatprep.subr.bf16.mxu0 0
    %1678 = vmatpush1.bf16.msra.mxu0 0
    %1679 = vmatprep.subr.bf16.mxu0 0
    %1680 = vmatpush1.bf16.msra.mxu0 0
    %1681 = vmatprep.subr.bf16.mxu0 0
    %1682 = vmatpush1.bf16.msra.mxu0 0
    %1683 = vmatprep.subr.bf16.mxu0 0
    %1684 = vmatpush1.bf16.msra.mxu0 0
    %1685 = vmatprep.subr.bf16.mxu0 0
    %1686 = vmatpush1.bf16.msra.mxu0 0
    %1687 = vmatprep.mubr.bf16.mxu0 0
    %1688 = vmatmul.mubr.bf16.gmra.mrb[0].mxu0 %v1654
    %v1689 = vpop.f32.mrb[0].mxu0
    %v1690 = vadd.f32 %v169, %v1689
    %v1691 = vpop.f32.mrb[0].mxu0
    %v1692 = vpop.f32.mrb[0].mxu0
    %v1693 = vpop.f32.mrb[0].mxu0
    %1694 = vdwg.mxu0
    %v1695 = vpack.c.bf16 %v1690, %v1690
    %s1696 = scalar_lea.vmem %s8, 20
    %1697 = vst [vmem:[%s1696] sm:$0xf] %v1695
    %s1698 = scalar_lea.vmem %s0, 24
    %v1699 = vld [vmem:[%s1698] sm:$0xf]
    %v1701 = vsel %vm179, %v1699, 0
    %1703 = vmatprep.subr.bf16.mxu0 0
    %1704 = vmatpush1.bf16.msra.mxu0 %v177
    %1705 = vmatprep.subr.bf16.mxu0 0
    %1706 = vmatpush1.bf16.msra.mxu0 0
    %1707 = vmatprep.subr.bf16.mxu0 0
    %1708 = vmatpush1.bf16.msra.mxu0 0
    %1709 = vmatprep.subr.bf16.mxu0 0
    %1710 = vmatpush1.bf16.msra.mxu0 0
    %1711 = vmatprep.subr.bf16.mxu0 0
    %1712 = vmatpush1.bf16.msra.mxu0 0
    %1713 = vmatprep.subr.bf16.mxu0 0
    %1714 = vmatpush1.bf16.msra.mxu0 0
    %1715 = vmatprep.subr.bf16.mxu0 0
    %1716 = vmatpush1.bf16.msra.mxu0 0
    %1717 = vmatprep.subr.bf16.mxu0 0
    %1718 = vmatpush1.bf16.msra.mxu0 0
    %1719 = vmatprep.subr.bf16.mxu0 0
    %1720 = vmatpush1.bf16.msra.mxu0 0
    %1721 = vmatprep.subr.bf16.mxu0 0
    %1722 = vmatpush1.bf16.msra.mxu0 0
    %1723 = vmatprep.subr.bf16.mxu0 0
    %1724 = vmatpush1.bf16.msra.mxu0 0
    %1725 = vmatprep.subr.bf16.mxu0 0
    %1726 = vmatpush1.bf16.msra.mxu0 0
    %1727 = vmatprep.subr.bf16.mxu0 0
    %1728 = vmatpush1.bf16.msra.mxu0 0
    %1729 = vmatprep.subr.bf16.mxu0 0
    %1730 = vmatpush1.bf16.msra.mxu0 0
    %1731 = vmatprep.subr.bf16.mxu0 0
    %1732 = vmatpush1.bf16.msra.mxu0 0
    %1733 = vmatprep.subr.bf16.mxu0 0
    %1734 = vmatpush1.bf16.msra.mxu0 0
    %1735 = vmatprep.mubr.bf16.mxu0 0
    %1736 = vmatmul.mubr.bf16.gmra.mrb[0].mxu0 %v1701
    %v1737 = vpop.f32.mrb[0].mxu0
    %v1738 = vadd.f32 %v140, %v1737
    %v1739 = vpop.f32.mrb[0].mxu0
    %v1740 = vpop.f32.mrb[0].mxu0
    %v1741 = vpop.f32.mrb[0].mxu0
    %1742 = vdwg.mxu0
    %v1743 = vmax.f32 %v1738, 0.0
    %v1744 = vpack.c.bf16 %v1743, %v1743
    %1745 = vmatprep.subr.bf16.mxu0 %v419
    %1746 = vmatpush1.bf16.msra.mxu0 %v418
    %1747 = vmatprep.subr.bf16.mxu0 %v423
    %1748 = vmatpush1.bf16.msra.mxu0 %v422
    %1749 = vmatprep.subr.bf16.mxu0 %v427
    %1750 = vmatpush1.bf16.msra.mxu0 %v426
    %1751 = vmatprep.subr.bf16.mxu0 %v431
    %1752 = vmatpush1.bf16.msra.mxu0 %v430
    %1753 = vmatprep.subr.bf16.mxu0 %v435
    %1754 = vmatpush1.bf16.msra.mxu0 %v434
    %1755 = vmatprep.subr.bf16.mxu0 %v439
    %1756 = vmatpush1.bf16.msra.mxu0 %v438
    %1757 = vmatprep.subr.bf16.mxu0 %v443
    %1758 = vmatpush1.bf16.msra.mxu0 %v442
    %1759 = vmatprep.subr.bf16.mxu0 %v447
    %1760 = vmatpush1.bf16.msra.mxu0 %v446
    %1761 = vmatprep.subr.bf16.mxu0 %v451
    %1762 = vmatpush1.bf16.msra.mxu0 %v450
    %1763 = vmatprep.subr.bf16.mxu0 %v455
    %1764 = vmatpush1.bf16.msra.mxu0 %v454
    %1765 = vmatprep.subr.bf16.mxu0 %v459
    %1766 = vmatpush1.bf16.msra.mxu0 %v458
    %1767 = vmatprep.subr.bf16.mxu0 %v463
    %1768 = vmatpush1.bf16.msra.mxu0 %v462
    %1769 = vmatprep.subr.bf16.mxu0 %v467
    %1770 = vmatpush1.bf16.msra.mxu0 %v466
    %1771 = vmatprep.subr.bf16.mxu0 %v471
    %1772 = vmatpush1.bf16.msra.mxu0 %v470
    %1773 = vmatprep.subr.bf16.mxu0 %v475
    %1774 = vmatpush1.bf16.msra.mxu0 %v474
    %1775 = vmatprep.subr.bf16.mxu0 %v479
    %1776 = vmatpush1.bf16.msra.mxu0 %v478
    %1777 = vmatprep.mubr.bf16.mxu0 %v1654
    %1778 = vmatmul.mubr.bf16.gmra.mrb[0].mxu0 %v1744
    %v1779 = vpop.f32.mrb[0].mxu0
    %v1780 = vadd.f32 %v147, %v1779
    %v1781 = vpop.f32.mrb[0].mxu0
    %v1782 = vadd.f32 %v151, %v1781
    %v1783 = vpop.f32.mrb[0].mxu0
    %v1784 = vpop.f32.mrb[0].mxu0
    %1785 = vdwg.mxu0
    %1786 = vmatprep.subr.bf16.mxu0 %v421
    %1787 = vmatpush1.bf16.msra.mxu0 %v420
    %1788 = vmatprep.subr.bf16.mxu0 %v425
    %1789 = vmatpush1.bf16.msra.mxu0 %v424
    %1790 = vmatprep.subr.bf16.mxu0 %v429
    %1791 = vmatpush1.bf16.msra.mxu0 %v428
    %1792 = vmatprep.subr.bf16.mxu0 %v433
    %1793 = vmatpush1.bf16.msra.mxu0 %v432
    %1794 = vmatprep.subr.bf16.mxu0 %v437
    %1795 = vmatpush1.bf16.msra.mxu0 %v436
    %1796 = vmatprep.subr.bf16.mxu0 %v441
    %1797 = vmatpush1.bf16.msra.mxu0 %v440
    %1798 = vmatprep.subr.bf16.mxu0 %v445
    %1799 = vmatpush1.bf16.msra.mxu0 %v444
    %1800 = vmatprep.subr.bf16.mxu0 %v449
    %1801 = vmatpush1.bf16.msra.mxu0 %v448
    %1802 = vmatprep.subr.bf16.mxu0 %v453
    %1803 = vmatpush1.bf16.msra.mxu0 %v452
    %1804 = vmatprep.subr.bf16.mxu0 %v457
    %1805 = vmatpush1.bf16.msra.mxu0 %v456
    %1806 = vmatprep.subr.bf16.mxu0 %v461
    %1807 = vmatpush1.bf16.msra.mxu0 %v460
    %1808 = vmatprep.subr.bf16.mxu0 %v465
    %1809 = vmatpush1.bf16.msra.mxu0 %v464
    %1810 = vmatprep.subr.bf16.mxu0 %v469
    %1811 = vmatpush1.bf16.msra.mxu0 %v468
    %1812 = vmatprep.subr.bf16.mxu0 %v473
    %1813 = vmatpush1.bf16.msra.mxu0 %v472
    %1814 = vmatprep.subr.bf16.mxu0 %v477
    %1815 = vmatpush1.bf16.msra.mxu0 %v476
    %1816 = vmatprep.subr.bf16.mxu0 %v481
    %1817 = vmatpush1.bf16.msra.mxu0 %v480
    %1818 = vmatprep.mubr.bf16.mxu0 %v1654
    %1819 = vmatmul.mubr.bf16.gmra.mrb[0].mxu0 %v1744
    %v1820 = vpop.f32.mrb[0].mxu0
    %v1821 = vadd.f32 %v155, %v1820
    %v1822 = vpop.f32.mrb[0].mxu0
    %v1823 = vadd.f32 %v159, %v1822
    %v1824 = vpop.f32.mrb[0].mxu0
    %v1825 = vpop.f32.mrb[0].mxu0
    %1826 = vdwg.mxu0
    %v1827 = vxor.u32 %v1780, 2147483648
    %v1828 = vmul.f32 %v1827, 1.442695
    %v1829 = vpow.pop %v1828
    %v1830 = vadd.f32 %v1829, 1.0
    %v1831 = vrcp.pop %v1830
    %v1832 = vmul.f32 1.0, %v1831
    %v1833 = vxor.u32 %v1782, 2147483648
    %v1834 = vmul.f32 %v1833, 1.442695
    %v1835 = vpow.pop %v1834
    %v1836 = vadd.f32 %v1835, 1.0
    %v1837 = vrcp.pop %v1836
    %v1838 = vmul.f32 1.0, %v1837
    %v1839 = vmul.f32 %v1832, %v1823
    %v1840 = vadd.f32 %v1821, %v1839
    %v1841 = vtanh.pop %v1840
    %v1842 = vsub.f32 1.0, %v1838
    %v1843 = vmul.f32 %v1842, %v1841
    %v1844 = vmul.f32 %v1838, %v1653
    %v1845 = vadd.f32 %v1843, %v1844
    %v1846 = vpack.c.bf16 %v1845, %v1845
    %1847 = vmatprep.subr.bf16.mxu0 0
    %1848 = vmatpush1.bf16.msra.mxu0 %v680
    %1849 = vmatprep.subr.bf16.mxu0 0
    %1850 = vmatpush1.bf16.msra.mxu0 %v681
    %1851 = vmatprep.subr.bf16.mxu0 0
    %1852 = vmatpush1.bf16.msra.mxu0 %v682
    %1853 = vmatprep.subr.bf16.mxu0 0
    %1854 = vmatpush1.bf16.msra.mxu0 %v683
    %1855 = vmatprep.subr.bf16.mxu0 0
    %1856 = vmatpush1.bf16.msra.mxu0 %v684
    %1857 = vmatprep.subr.bf16.mxu0 0
    %1858 = vmatpush1.bf16.msra.mxu0 %v685
    %1859 = vmatprep.subr.bf16.mxu0 0
    %1860 = vmatpush1.bf16.msra.mxu0 %v686
    %1861 = vmatprep.subr.bf16.mxu0 0
    %1862 = vmatpush1.bf16.msra.mxu0 %v687
    %1863 = vmatprep.subr.bf16.mxu0 0
    %1864 = vmatpush1.bf16.msra.mxu0 0
    %1865 = vmatprep.subr.bf16.mxu0 0
    %1866 = vmatpush1.bf16.msra.mxu0 0
    %1867 = vmatprep.subr.bf16.mxu0 0
    %1868 = vmatpush1.bf16.msra.mxu0 0
    %1869 = vmatprep.subr.bf16.mxu0 0
    %1870 = vmatpush1.bf16.msra.mxu0 0
    %1871 = vmatprep.subr.bf16.mxu0 0
    %1872 = vmatpush1.bf16.msra.mxu0 0
    %1873 = vmatprep.subr.bf16.mxu0 0
    %1874 = vmatpush1.bf16.msra.mxu0 0
    %1875 = vmatprep.subr.bf16.mxu0 0
    %1876 = vmatpush1.bf16.msra.mxu0 0
    %1877 = vmatprep.subr.bf16.mxu0 0
    %1878 = vmatpush1.bf16.msra.mxu0 0
    %1879 = vmatprep.mubr.bf16.mxu0 0
    %1880 = vmatmul.mubr.bf16.gmra.mrb[0].mxu0 %v1846
    %v1881 = vpop.f32.mrb[0].mxu0
    %v1882 = vadd.f32 %v169, %v1881
    %v1883 = vpop.f32.mrb[0].mxu0
    %v1884 = vpop.f32.mrb[0].mxu0
    %v1885 = vpop.f32.mrb[0].mxu0
    %1886 = vdwg.mxu0
    %v1887 = vpack.c.bf16 %v1882, %v1882
    %s1888 = scalar_lea.vmem %s8, 24
    %1889 = vst [vmem:[%s1888] sm:$0xf] %v1887
    %s1890 = scalar_lea.vmem %s0, 28
    %v1891 = vld [vmem:[%s1890] sm:$0xf]
    %v1893 = vsel %vm179, %v1891, 0
    %1895 = vmatprep.subr.bf16.mxu0 0
    %1896 = vmatpush1.bf16.msra.mxu0 %v177
    %1897 = vmatprep.subr.bf16.mxu0 0
    %1898 = vmatpush1.bf16.msra.mxu0 0
    %1899 = vmatprep.subr.bf16.mxu0 0
    %1900 = vmatpush1.bf16.msra.mxu0 0
    %1901 = vmatprep.subr.bf16.mxu0 0
    %1902 = vmatpush1.bf16.msra.mxu0 0
    %1903 = vmatprep.subr.bf16.mxu0 0
    %1904 = vmatpush1.bf16.msra.mxu0 0
    %1905 = vmatprep.subr.bf16.mxu0 0
    %1906 = vmatpush1.bf16.msra.mxu0 0
    %1907 = vmatprep.subr.bf16.mxu0 0
    %1908 = vmatpush1.bf16.msra.mxu0 0
    %1909 = vmatprep.subr.bf16.mxu0 0
    %1910 = vmatpush1.bf16.msra.mxu0 0
    %1911 = vmatprep.subr.bf16.mxu0 0
    %1912 = vmatpush1.bf16.msra.mxu0 0
    %1913 = vmatprep.subr.bf16.mxu0 0
    %1914 = vmatpush1.bf16.msra.mxu0 0
    %1915 = vmatprep.subr.bf16.mxu0 0
    %1916 = vmatpush1.bf16.msra.mxu0 0
    %1917 = vmatprep.subr.bf16.mxu0 0
    %1918 = vmatpush1.bf16.msra.mxu0 0
    %1919 = vmatprep.subr.bf16.mxu0 0
    %1920 = vmatpush1.bf16.msra.mxu0 0
    %1921 = vmatprep.subr.bf16.mxu0 0
    %1922 = vmatpush1.bf16.msra.mxu0 0
    %1923 = vmatprep.subr.bf16.mxu0 0
    %1924 = vmatpush1.bf16.msra.mxu0 0
    %1925 = vmatprep.subr.bf16.mxu0 0
    %1926 = vmatpush1.bf16.msra.mxu0 0
    %1927 = vmatprep.mubr.bf16.mxu0 0
    %1928 = vmatmul.mubr.bf16.gmra.mrb[0].mxu0 %v1893
    %v1929 = vpop.f32.mrb[0].mxu0
    %v1930 = vadd.f32 %v140, %v1929
    %v1931 = vpop.f32.mrb[0].mxu0
    %v1932 = vpop.f32.mrb[0].mxu0
    %v1933 = vpop.f32.mrb[0].mxu0
    %1934 = vdwg.mxu0
    %v1935 = vmax.f32 %v1930, 0.0
    %v1936 = vpack.c.bf16 %v1935, %v1935
    %1937 = vmatprep.subr.bf16.mxu0 %v419
    %1938 = vmatpush1.bf16.msra.mxu0 %v418
    %1939 = vmatprep.subr.bf16.mxu0 %v423
    %1940 = vmatpush1.bf16.msra.mxu0 %v422
    %1941 = vmatprep.subr.bf16.mxu0 %v427
    %1942 = vmatpush1.bf16.msra.mxu0 %v426
    %1943 = vmatprep.subr.bf16.mxu0 %v431
    %1944 = vmatpush1.bf16.msra.mxu0 %v430
    %1945 = vmatprep.subr.bf16.mxu0 %v435
    %1946 = vmatpush1.bf16.msra.mxu0 %v434
    %1947 = vmatprep.subr.bf16.mxu0 %v439
    %1948 = vmatpush1.bf16.msra.mxu0 %v438
    %1949 = vmatprep.subr.bf16.mxu0 %v443
    %1950 = vmatpush1.bf16.msra.mxu0 %v442
    %1951 = vmatprep.subr.bf16.mxu0 %v447
    %1952 = vmatpush1.bf16.msra.mxu0 %v446
    %1953 = vmatprep.subr.bf16.mxu0 %v451
    %1954 = vmatpush1.bf16.msra.mxu0 %v450
    %1955 = vmatprep.subr.bf16.mxu0 %v455
    %1956 = vmatpush1.bf16.msra.mxu0 %v454
    %1957 = vmatprep.subr.bf16.mxu0 %v459
    %1958 = vmatpush1.bf16.msra.mxu0 %v458
    %1959 = vmatprep.subr.bf16.mxu0 %v463
    %1960 = vmatpush1.bf16.msra.mxu0 %v462
    %1961 = vmatprep.subr.bf16.mxu0 %v467
    %1962 = vmatpush1.bf16.msra.mxu0 %v466
    %1963 = vmatprep.subr.bf16.mxu0 %v471
    %1964 = vmatpush1.bf16.msra.mxu0 %v470
    %1965 = vmatprep.subr.bf16.mxu0 %v475
    %1966 = vmatpush1.bf16.msra.mxu0 %v474
    %1967 = vmatprep.subr.bf16.mxu0 %v479
    %1968 = vmatpush1.bf16.msra.mxu0 %v478
    %1969 = vmatprep.mubr.bf16.mxu0 %v1846
    %1970 = vmatmul.mubr.bf16.gmra.mrb[0].mxu0 %v1936
    %v1971 = vpop.f32.mrb[0].mxu0
    %v1972 = vadd.f32 %v147, %v1971
    %v1973 = vpop.f32.mrb[0].mxu0
    %v1974 = vadd.f32 %v151, %v1973
    %v1975 = vpop.f32.mrb[0].mxu0
    %v1976 = vpop.f32.mrb[0].mxu0
    %1977 = vdwg.mxu0
    %1978 = vmatprep.subr.bf16.mxu0 %v421
    %1979 = vmatpush1.bf16.msra.mxu0 %v420
    %1980 = vmatprep.subr.bf16.mxu0 %v425
    %1981 = vmatpush1.bf16.msra.mxu0 %v424
    %1982 = vmatprep.subr.bf16.mxu0 %v429
    %1983 = vmatpush1.bf16.msra.mxu0 %v428
    %1984 = vmatprep.subr.bf16.mxu0 %v433
    %1985 = vmatpush1.bf16.msra.mxu0 %v432
    %1986 = vmatprep.subr.bf16.mxu0 %v437
    %1987 = vmatpush1.bf16.msra.mxu0 %v436
    %1988 = vmatprep.subr.bf16.mxu0 %v441
    %1989 = vmatpush1.bf16.msra.mxu0 %v440
    %1990 = vmatprep.subr.bf16.mxu0 %v445
    %1991 = vmatpush1.bf16.msra.mxu0 %v444
    %1992 = vmatprep.subr.bf16.mxu0 %v449
    %1993 = vmatpush1.bf16.msra.mxu0 %v448
    %1994 = vmatprep.subr.bf16.mxu0 %v453
    %1995 = vmatpush1.bf16.msra.mxu0 %v452
    %1996 = vmatprep.subr.bf16.mxu0 %v457
    %1997 = vmatpush1.bf16.msra.mxu0 %v456
    %1998 = vmatprep.subr.bf16.mxu0 %v461
    %1999 = vmatpush1.bf16.msra.mxu0 %v460
    %2000 = vmatprep.subr.bf16.mxu0 %v465
    %2001 = vmatpush1.bf16.msra.mxu0 %v464
    %2002 = vmatprep.subr.bf16.mxu0 %v469
    %2003 = vmatpush1.bf16.msra.mxu0 %v468
    %2004 = vmatprep.subr.bf16.mxu0 %v473
    %2005 = vmatpush1.bf16.msra.mxu0 %v472
    %2006 = vmatprep.subr.bf16.mxu0 %v477
    %2007 = vmatpush1.bf16.msra.mxu0 %v476
    %2008 = vmatprep.subr.bf16.mxu0 %v481
    %2009 = vmatpush1.bf16.msra.mxu0 %v480
    %2010 = vmatprep.mubr.bf16.mxu0 %v1846
    %2011 = vmatmul.mubr.bf16.gmra.mrb[0].mxu0 %v1936
    %v2012 = vpop.f32.mrb[0].mxu0
    %v2013 = vadd.f32 %v155, %v2012
    %v2014 = vpop.f32.mrb[0].mxu0
    %v2015 = vadd.f32 %v159, %v2014
    %v2016 = vpop.f32.mrb[0].mxu0
    %v2017 = vpop.f32.mrb[0].mxu0
    %2018 = vdwg.mxu0
    %v2019 = vxor.u32 %v1972, 2147483648
    %v2020 = vmul.f32 %v2019, 1.442695
    %v2021 = vpow.pop %v2020
    %v2022 = vadd.f32 %v2021, 1.0
    %v2023 = vrcp.pop %v2022
    %v2024 = vmul.f32 1.0, %v2023
    %v2025 = vxor.u32 %v1974, 2147483648
    %v2026 = vmul.f32 %v2025, 1.442695
    %v2027 = vpow.pop %v2026
    %v2028 = vadd.f32 %v2027, 1.0
    %v2029 = vrcp.pop %v2028
    %v2030 = vmul.f32 1.0, %v2029
    %v2031 = vmul.f32 %v2024, %v2015
    %v2032 = vadd.f32 %v2013, %v2031
    %v2033 = vtanh.pop %v2032
    %v2034 = vsub.f32 1.0, %v2030
    %v2035 = vmul.f32 %v2034, %v2033
    %v2036 = vmul.f32 %v2030, %v1845
    %v2037 = vadd.f32 %v2035, %v2036
    %v2038 = vpack.c.bf16 %v2037, %v2037
    %2039 = vmatprep.subr.bf16.mxu0 0
    %2040 = vmatpush1.bf16.msra.mxu0 %v680
    %2041 = vmatprep.subr.bf16.mxu0 0
    %2042 = vmatpush1.bf16.msra.mxu0 %v681
    %2043 = vmatprep.subr.bf16.mxu0 0
    %2044 = vmatpush1.bf16.msra.mxu0 %v682
    %2045 = vmatprep.subr.bf16.mxu0 0
    %2046 = vmatpush1.bf16.msra.mxu0 %v683
    %2047 = vmatprep.subr.bf16.mxu0 0
    %2048 = vmatpush1.bf16.msra.mxu0 %v684
    %2049 = vmatprep.subr.bf16.mxu0 0
    %2050 = vmatpush1.bf16.msra.mxu0 %v685
    %2051 = vmatprep.subr.bf16.mxu0 0
    %2052 = vmatpush1.bf16.msra.mxu0 %v686
    %2053 = vmatprep.subr.bf16.mxu0 0
    %2054 = vmatpush1.bf16.msra.mxu0 %v687
    %2055 = vmatprep.subr.bf16.mxu0 0
    %2056 = vmatpush1.bf16.msra.mxu0 0
    %2057 = vmatprep.subr.bf16.mxu0 0
    %2058 = vmatpush1.bf16.msra.mxu0 0
    %2059 = vmatprep.subr.bf16.mxu0 0
    %2060 = vmatpush1.bf16.msra.mxu0 0
    %2061 = vmatprep.subr.bf16.mxu0 0
    %2062 = vmatpush1.bf16.msra.mxu0 0
    %2063 = vmatprep.subr.bf16.mxu0 0
    %2064 = vmatpush1.bf16.msra.mxu0 0
    %2065 = vmatprep.subr.bf16.mxu0 0
    %2066 = vmatpush1.bf16.msra.mxu0 0
    %2067 = vmatprep.subr.bf16.mxu0 0
    %2068 = vmatpush1.bf16.msra.mxu0 0
    %2069 = vmatprep.subr.bf16.mxu0 0
    %2070 = vmatpush1.bf16.msra.mxu0 0
    %2071 = vmatprep.mubr.bf16.mxu0 0
    %2072 = vmatmul.mubr.bf16.gmra.mrb[0].mxu0 %v2038
    %v2073 = vpop.f32.mrb[0].mxu0
    %v2074 = vadd.f32 %v169, %v2073
    %v2075 = vpop.f32.mrb[0].mxu0
    %v2076 = vpop.f32.mrb[0].mxu0
    %v2077 = vpop.f32.mrb[0].mxu0
    %2078 = vdwg.mxu0
    %v2079 = vpack.c.bf16 %v2074, %v2074
    %s2080 = scalar_lea.vmem %s8, 28
    %2081 = vst [vmem:[%s2080] sm:$0xf] %v2079
    %2082 = vst [vmem:[#allocation2] sm:$0xff] %v2037
    // Predicated region
    $region42: #{rnn_agent_forward_seq.1} parent=1 // pred_check
      %p2083 = pneg %p47
    $region43: #{rnn_agent_forward_seq.1} parent=1 // pred_check_branch
      %2085 = sbr.rel (%p2083) target = $region45
    $region44: #{rnn_agent_forward_seq.1} parent=1 // pred_region
      %2086 = vst [vmem:[#allocation6] sm:$0xff] %v2037
    $region45: #{rnn_agent_forward_seq.1} parent=1 // pred_fallthru
      _
    // Predicated region
    $region46: #{rnn_agent_forward_seq.1} parent=1 // pred_check
      _
    $region47: #{rnn_agent_forward_seq.1} parent=1 // pred_check_branch
      %2088 = sbr.rel (0) target = $region49
    $region48: #{rnn_agent_forward_seq.1} parent=1 // pred_region
      _
    $region49: #{rnn_agent_forward_seq.1} parent=1 // pred_fallthru
      _
    // Predicated region
    $region50: #{rnn_agent_forward_seq.1} parent=1 // pred_check
      _
    $region51: #{rnn_agent_forward_seq.1} parent=1 // pred_check_branch
      %2090 = sbr.rel (0) target = $region53
    $region52: #{rnn_agent_forward_seq.1} parent=1 // pred_region
      %s2092 = ssub.s32 128, 128
      %2093 = vsyncadd [#allocation5], %s2092
      %s2095 = sshll.u32 [#allocation6], 4
      %s2096 = int_to_ptr.vmem [resolvable:$true] %s2095
      %2098 = dma.vmem_to_hbm [thread:$0]  %s2096, 128, %s9, [#allocation5]
    $region53: #{rnn_agent_forward_seq.1} parent=1 // pred_fallthru
      _
    // Predicated region
    $region54: #{rnn_agent_forward_seq.1} parent=1 // pred_check
      _
    $region55: #{rnn_agent_forward_seq.1} parent=1 // pred_check_branch
      %2100 = sbr.rel (0) target = $region57
    $region56: #{rnn_agent_forward_seq.1} parent=1 // pred_region
      _
    $region57: #{rnn_agent_forward_seq.1} parent=1 // pred_fallthru
      _
    // Predicated region
    $region58: #{rnn_agent_forward_seq.1} parent=1 // pred_check
      _
    $region59: #{rnn_agent_forward_seq.1} parent=1 // pred_check_branch
      %2102 = sbr.rel (0) target = $region61
    $region60: #{rnn_agent_forward_seq.1} parent=1 // pred_region
      %2103 = dma.done [#allocation5], 128
    $region61: #{rnn_agent_forward_seq.1} parent=1 // pred_fallthru
      _
    %2104 = vsyncpa [#allocation4], 1
    %2105 = vsyncpa [#allocation5], 1

</llo_original>
